<compile_context>
chip_gen: v6e
topology: v6e:2x2x1
jax: 0.10.0
libtpu: 0.0.40
codegen_flags: <defaults>
</compile_context>

<pallas_src>
import functools

import jax
import jax.numpy as jnp
from jax import lax
from jax.experimental import pallas as pl
from jax.experimental.pallas import tpu as pltpu


# ---------------------------------------------------------------------------
# Kernel: one batch image per grid step, everything fused.
# ---------------------------------------------------------------------------
def spatial_attention_kernel(x_ref, w_ref, o_ref, pad_ref, *, kernel_size,
                             padding):
    """x_ref: (1, C, H, W) VMEM; w_ref: (2*K*K,) SMEM (OIHW flattened, out=1);
    o_ref: (1, 1, H, W) VMEM; pad_ref: (2, H+2P, W+2P) VMEM scratch."""
    K = kernel_size
    P = padding
    H = o_ref.shape[2]
    W = o_ref.shape[3]

    # Channel pooling (reduce over the leading, non-tiled axis -> cheap VPU ops).
    xb = x_ref[0]                                   # (C, H, W)
    avg = jnp.mean(xb, axis=0)                      # (H, W)
    mx = jnp.max(xb, axis=0)                        # (H, W)

    # Zero-pad inside VMEM (no host-side jnp.pad / extra HBM roundtrip).
    # Re-zeroed every iteration so it is also correct when the "parallel"
    # batch axis is sharded across TensorCores.
    pad_ref[...] = jnp.zeros_like(pad_ref)
    pad_ref[0, pl.ds(P, H), pl.ds(P, W)] = avg
    pad_ref[1, pl.ds(P, H), pl.ds(P, W)] = mx

    # KxK 'same' conv, 2 in-channels -> 1 out-channel, no bias:
    # 2*K*K scalar-weight taps accumulated in f32 (MXU would be <1% utilized
    # at these channel counts, so this stays on the VPU).
    acc = jnp.zeros((H, W), jnp.float32)
    for c in range(2):
        for kh in range(K):
            for kw in range(K):
                wt = w_ref[c * K * K + kh * K + kw]          # SMEM scalar
                acc = acc + wt * pad_ref[c, kh:kh + H, kw:kw + W]

    # Sigmoid on the EUP.
    o_ref[0, 0] = 1.0 / (1.0 + jnp.exp(-acc))


# ---------------------------------------------------------------------------
# Host-side wrapper
# ---------------------------------------------------------------------------
def spatial_attention_forward(x_nchw, weight, kernel_size=7):
    """x_nchw: (N, C, H, W); weight: (1, 2, K, K) (PyTorch OIHW). -> (N, 1, H, W)."""
    assert kernel_size in (3, 7), "kernel size must be 3 or 7."
    padding = 1 if kernel_size == 3 else 3
    N, C, H, W = x_nchw.shape
    x = x_nchw.astype(jnp.float32)
    w_flat = weight.astype(jnp.float32).reshape(-1)          # (2*K*K,)

    kernel = functools.partial(spatial_attention_kernel,
                               kernel_size=kernel_size, padding=padding)
    return pl.pallas_call(
        kernel,
        out_shape=jax.ShapeDtypeStruct((N, 1, H, W), jnp.float32),
        grid=(N,),
        in_specs=[
            pl.BlockSpec((1, C, H, W), lambda n: (n, 0, 0, 0)),
            pl.BlockSpec(memory_space=pltpu.MemorySpace.SMEM),
        ],
        out_specs=pl.BlockSpec((1, 1, H, W), lambda n: (n, 0, 0, 0)),
        scratch_shapes=[
            pltpu.VMEM((2, H + 2 * padding, W + 2 * padding), jnp.float32),
        ],
        compiler_params=pltpu.CompilerParams(
            dimension_semantics=("parallel",)),
    )(x, w_flat)
    # TODO(synk): for production image sizes, tile H/W (W padded to a multiple
    # of 128 for a lane-dense store path) instead of one whole image per step.


# ---------------------------------------------------------------------------
# Deterministic parameter init (Conv2d(2, 1, k, bias=False) default init)
# ---------------------------------------------------------------------------
def init_weight(key, kernel_size=7):
    fan_in = 2 * kernel_size * kernel_size
    bound = 1.0 / (fan_in ** 0.5)        # kaiming_uniform(a=sqrt(5)) bound
    return jax.random.uniform(key, (1, 2, kernel_size, kernel_size),
                              jnp.float32, -bound, bound)


# ---------------------------------------------------------------------------
# Pure-JAX reference (correctness check only)
# ---------------------------------------------------------------------------
def reference_forward(x_nchw, weight, kernel_size=7):
    padding = 1 if kernel_size == 3 else 3
    x = x_nchw.astype(jnp.float32)
    avg = jnp.mean(x, axis=1, keepdims=True)
    mx = jnp.max(x, axis=1, keepdims=True)
    pool = jnp.concatenate([avg, mx], axis=1)                 # (N, 2, H, W)
    y = lax.conv_general_dilated(
        pool, weight.astype(jnp.float32), window_strides=(1, 1),
        padding=((padding, padding), (padding, padding)),
        dimension_numbers=("NCHW", "OIHW", "NCHW"))
    return jax.nn.sigmoid(y)


# ---------------------------------------------------------------------------
if __name__ == "__main__":
    key = jax.random.PRNGKey(0)
    kx, kw = jax.random.split(key)

    N, C, H, W = 2, 4, 16, 16
    x = jax.random.normal(kx, (N, C, H, W), jnp.float32)
    w = init_weight(kw, kernel_size=7)

    out = jax.block_until_ready(spatial_attention_forward(x, w, kernel_size=7))
    ref = jax.block_until_ready(reference_forward(x, w, kernel_size=7))

    assert out.shape == (N, 1, H, W), out.shape
    max_err = float(jnp.max(jnp.abs(out - ref)))
    assert jnp.allclose(out, ref, atol=2e-5, rtol=1e-5), max_err

    print("KERNEL_OK")
</pallas_src>

<mosaic_0001>
module attributes {stable_mosaic.version = 11 : i64} {
  func.func @spatial_attention_kernel(%arg0: i32, %arg1: memref<1x4x16x16xf32, #tpu.memory_space<vmem>>, %arg2: memref<98xf32, #tpu.memory_space<smem>>, %arg3: memref<1x1x16x16xf32, #tpu.memory_space<vmem>>, %arg4: memref<2x22x22xf32, #tpu.memory_space<vmem>>) attributes {dimension_semantics = [#tpu.dimension_semantics<parallel>], iteration_bounds = array<i64: 2>, scalar_prefetch = 0 : i64, scratch_operands = 1 : i64, tpu.core_type = #tpu.core_type<tc>, window_params = [{transform_indices = @transform_0, window_bounds = array<i64: 1, 4, 16, 16>}, {transform_indices = @transform_1, window_bounds = array<i64: 98>}, {transform_indices = @transform_2, window_bounds = array<i64: 1, 1, 16, 16>}]} {
    %c0 = arith.constant 0 : index
    %c0_0 = arith.constant 0 : index
    %c0_1 = arith.constant 0 : index
    %c0_2 = arith.constant 0 : index
    %0 = vector.load %arg1[%c0, %c0_0, %c0_1, %c0_2] : memref<1x4x16x16xf32, #tpu.memory_space<vmem>>, vector<1x4x16x16xf32>
    %1 = vector.shape_cast %0 : vector<1x4x16x16xf32> to vector<4x16x16xf32>
    %cst = arith.constant dense<0.000000e+00> : vector<16x16xf32>
    %2 = vector.multi_reduction <add>, %1, %cst [0] : vector<4x16x16xf32> to vector<16x16xf32>
    %cst_3 = arith.constant 4.000000e+00 : f32
    %3 = vector.broadcast %cst_3 : f32 to vector<16x16xf32>
    %4 = arith.divf %2, %3 : vector<16x16xf32>
    %cst_4 = arith.constant dense<0xFF800000> : vector<16x16xf32>
    %5 = vector.multi_reduction <maximumf>, %1, %cst_4 [0] : vector<4x16x16xf32> to vector<16x16xf32>
    %cst_5 = arith.constant 0.000000e+00 : f32
    %6 = vector.broadcast %cst_5 : f32 to vector<2x22x22xf32>
    %c0_6 = arith.constant 0 : index
    %c0_7 = arith.constant 0 : index
    %c0_8 = arith.constant 0 : index
    %7 = vector.load %arg4[%c0_6, %c0_7, %c0_8] : memref<2x22x22xf32, #tpu.memory_space<vmem>>, vector<2x22x22xf32>
    tpu.vector_store %arg4[%c0_6, %c0_7, %c0_8], %6 {strides = array<i32>} : memref<2x22x22xf32, #tpu.memory_space<vmem>>, vector<2x22x22xf32>,
    %c0_9 = arith.constant 0 : index
    %c3 = arith.constant 3 : index
    %c3_10 = arith.constant 3 : index
    %8 = vector.load %arg4[%c0_9, %c3, %c3_10] : memref<2x22x22xf32, #tpu.memory_space<vmem>>, vector<1x16x16xf32>
    %9 = vector.shape_cast %8 : vector<1x16x16xf32> to vector<16x16xf32>
    %10 = vector.shape_cast %4 : vector<16x16xf32> to vector<1x16x16xf32>
    tpu.vector_store %arg4[%c0_9, %c3, %c3_10], %10 {strides = array<i32>} : memref<2x22x22xf32, #tpu.memory_space<vmem>>, vector<1x16x16xf32>,
    %c1 = arith.constant 1 : index
    %c3_11 = arith.constant 3 : index
    %c3_12 = arith.constant 3 : index
    %11 = vector.load %arg4[%c1, %c3_11, %c3_12] : memref<2x22x22xf32, #tpu.memory_space<vmem>>, vector<1x16x16xf32>
    %12 = vector.shape_cast %11 : vector<1x16x16xf32> to vector<16x16xf32>
    %13 = vector.shape_cast %5 : vector<16x16xf32> to vector<1x16x16xf32>
    tpu.vector_store %arg4[%c1, %c3_11, %c3_12], %13 {strides = array<i32>} : memref<2x22x22xf32, #tpu.memory_space<vmem>>, vector<1x16x16xf32>,
    %cst_13 = arith.constant 0.000000e+00 : f32
    %14 = vector.broadcast %cst_13 : f32 to vector<16x16xf32>
    %c0_14 = arith.constant 0 : index
    %15 = memref.load %arg2[%c0_14] : memref<98xf32, #tpu.memory_space<smem>>
    %c0_15 = arith.constant 0 : index
    %c0_16 = arith.constant 0 : index
    %c0_17 = arith.constant 0 : index
    %16 = vector.load %arg4[%c0_15, %c0_16, %c0_17] : memref<2x22x22xf32, #tpu.memory_space<vmem>>, vector<1x16x16xf32>
    %17 = vector.shape_cast %16 : vector<1x16x16xf32> to vector<16x16xf32>
    %18 = vector.broadcast %15 : f32 to vector<16x16xf32>
    %19 = arith.mulf %18, %17 : vector<16x16xf32>
    %20 = arith.addf %14, %19 : vector<16x16xf32>
    %c1_18 = arith.constant 1 : index
    %21 = memref.load %arg2[%c1_18] : memref<98xf32, #tpu.memory_space<smem>>
    %c0_19 = arith.constant 0 : index
    %c0_20 = arith.constant 0 : index
    %c1_21 = arith.constant 1 : index
    %22 = vector.load %arg4[%c0_19, %c0_20, %c1_21] : memref<2x22x22xf32, #tpu.memory_space<vmem>>, vector<1x16x16xf32>
    %23 = vector.shape_cast %22 : vector<1x16x16xf32> to vector<16x16xf32>
    %24 = vector.broadcast %21 : f32 to vector<16x16xf32>
    %25 = arith.mulf %24, %23 : vector<16x16xf32>
    %26 = arith.addf %20, %25 : vector<16x16xf32>
    %c2 = arith.constant 2 : index
    %27 = memref.load %arg2[%c2] : memref<98xf32, #tpu.memory_space<smem>>
    %c0_22 = arith.constant 0 : index
    %c0_23 = arith.constant 0 : index
    %c2_24 = arith.constant 2 : index
    %28 = vector.load %arg4[%c0_22, %c0_23, %c2_24] : memref<2x22x22xf32, #tpu.memory_space<vmem>>, vector<1x16x16xf32>
    %29 = vector.shape_cast %28 : vector<1x16x16xf32> to vector<16x16xf32>
    %30 = vector.broadcast %27 : f32 to vector<16x16xf32>
    %31 = arith.mulf %30, %29 : vector<16x16xf32>
    %32 = arith.addf %26, %31 : vector<16x16xf32>
    %c3_25 = arith.constant 3 : index
    %33 = memref.load %arg2[%c3_25] : memref<98xf32, #tpu.memory_space<smem>>
    %c0_26 = arith.constant 0 : index
    %c0_27 = arith.constant 0 : index
    %c3_28 = arith.constant 3 : index
    %34 = vector.load %arg4[%c0_26, %c0_27, %c3_28] : memref<2x22x22xf32, #tpu.memory_space<vmem>>, vector<1x16x16xf32>
    %35 = vector.shape_cast %34 : vector<1x16x16xf32> to vector<16x16xf32>
    %36 = vector.broadcast %33 : f32 to vector<16x16xf32>
    %37 = arith.mulf %36, %35 : vector<16x16xf32>
    %38 = arith.addf %32, %37 : vector<16x16xf32>
    %c4 = arith.constant 4 : index
    %39 = memref.load %arg2[%c4] : memref<98xf32, #tpu.memory_space<smem>>
    %c0_29 = arith.constant 0 : index
    %c0_30 = arith.constant 0 : index
    %c4_31 = arith.constant 4 : index
    %40 = vector.load %arg4[%c0_29, %c0_30, %c4_31] : memref<2x22x22xf32, #tpu.memory_space<vmem>>, vector<1x16x16xf32>
    %41 = vector.shape_cast %40 : vector<1x16x16xf32> to vector<16x16xf32>
    %42 = vector.broadcast %39 : f32 to vector<16x16xf32>
    %43 = arith.mulf %42, %41 : vector<16x16xf32>
    %44 = arith.addf %38, %43 : vector<16x16xf32>
    %c5 = arith.constant 5 : index
    %45 = memref.load %arg2[%c5] : memref<98xf32, #tpu.memory_space<smem>>
    %c0_32 = arith.constant 0 : index
    %c0_33 = arith.constant 0 : index
    %c5_34 = arith.constant 5 : index
    %46 = vector.load %arg4[%c0_32, %c0_33, %c5_34] : memref<2x22x22xf32, #tpu.memory_space<vmem>>, vector<1x16x16xf32>
    %47 = vector.shape_cast %46 : vector<1x16x16xf32> to vector<16x16xf32>
    %48 = vector.broadcast %45 : f32 to vector<16x16xf32>
    %49 = arith.mulf %48, %47 : vector<16x16xf32>
    %50 = arith.addf %44, %49 : vector<16x16xf32>
    %c6 = arith.constant 6 : index
    %51 = memref.load %arg2[%c6] : memref<98xf32, #tpu.memory_space<smem>>
    %c0_35 = arith.constant 0 : index
    %c0_36 = arith.constant 0 : index
    %c6_37 = arith.constant 6 : index
    %52 = vector.load %arg4[%c0_35, %c0_36, %c6_37] : memref<2x22x22xf32, #tpu.memory_space<vmem>>, vector<1x16x16xf32>
    %53 = vector.shape_cast %52 : vector<1x16x16xf32> to vector<16x16xf32>
    %54 = vector.broadcast %51 : f32 to vector<16x16xf32>
    %55 = arith.mulf %54, %53 : vector<16x16xf32>
    %56 = arith.addf %50, %55 : vector<16x16xf32>
    %c7 = arith.constant 7 : index
    %57 = memref.load %arg2[%c7] : memref<98xf32, #tpu.memory_space<smem>>
    %c0_38 = arith.constant 0 : index
    %c1_39 = arith.constant 1 : index
    %c0_40 = arith.constant 0 : index
    %58 = vector.load %arg4[%c0_38, %c1_39, %c0_40] : memref<2x22x22xf32, #tpu.memory_space<vmem>>, vector<1x16x16xf32>
    %59 = vector.shape_cast %58 : vector<1x16x16xf32> to vector<16x16xf32>
    %60 = vector.broadcast %57 : f32 to vector<16x16xf32>
    %61 = arith.mulf %60, %59 : vector<16x16xf32>
    %62 = arith.addf %56, %61 : vector<16x16xf32>
    %c8 = arith.constant 8 : index
    %63 = memref.load %arg2[%c8] : memref<98xf32, #tpu.memory_space<smem>>
    %c0_41 = arith.constant 0 : index
    %c1_42 = arith.constant 1 : index
    %c1_43 = arith.constant 1 : index
    %64 = vector.load %arg4[%c0_41, %c1_42, %c1_43] : memref<2x22x22xf32, #tpu.memory_space<vmem>>, vector<1x16x16xf32>
    %65 = vector.shape_cast %64 : vector<1x16x16xf32> to vector<16x16xf32>
    %66 = vector.broadcast %63 : f32 to vector<16x16xf32>
    %67 = arith.mulf %66, %65 : vector<16x16xf32>
    %68 = arith.addf %62, %67 : vector<16x16xf32>
    %c9 = arith.constant 9 : index
    %69 = memref.load %arg2[%c9] : memref<98xf32, #tpu.memory_space<smem>>
    %c0_44 = arith.constant 0 : index
    %c1_45 = arith.constant 1 : index
    %c2_46 = arith.constant 2 : index
    %70 = vector.load %arg4[%c0_44, %c1_45, %c2_46] : memref<2x22x22xf32, #tpu.memory_space<vmem>>, vector<1x16x16xf32>
    %71 = vector.shape_cast %70 : vector<1x16x16xf32> to vector<16x16xf32>
    %72 = vector.broadcast %69 : f32 to vector<16x16xf32>
    %73 = arith.mulf %72, %71 : vector<16x16xf32>
    %74 = arith.addf %68, %73 : vector<16x16xf32>
    %c10 = arith.constant 10 : index
    %75 = memref.load %arg2[%c10] : memref<98xf32, #tpu.memory_space<smem>>
    %c0_47 = arith.constant 0 : index
    %c1_48 = arith.constant 1 : index
    %c3_49 = arith.constant 3 : index
    %76 = vector.load %arg4[%c0_47, %c1_48, %c3_49] : memref<2x22x22xf32, #tpu.memory_space<vmem>>, vector<1x16x16xf32>
    %77 = vector.shape_cast %76 : vector<1x16x16xf32> to vector<16x16xf32>
    %78 = vector.broadcast %75 : f32 to vector<16x16xf32>
    %79 = arith.mulf %78, %77 : vector<16x16xf32>
    %80 = arith.addf %74, %79 : vector<16x16xf32>
    %c11 = arith.constant 11 : index
    %81 = memref.load %arg2[%c11] : memref<98xf32, #tpu.memory_space<smem>>
    %c0_50 = arith.constant 0 : index
    %c1_51 = arith.constant 1 : index
    %c4_52 = arith.constant 4 : index
    %82 = vector.load %arg4[%c0_50, %c1_51, %c4_52] : memref<2x22x22xf32, #tpu.memory_space<vmem>>, vector<1x16x16xf32>
    %83 = vector.shape_cast %82 : vector<1x16x16xf32> to vector<16x16xf32>
    %84 = vector.broadcast %81 : f32 to vector<16x16xf32>
    %85 = arith.mulf %84, %83 : vector<16x16xf32>
    %86 = arith.addf %80, %85 : vector<16x16xf32>
    %c12 = arith.constant 12 : index
    %87 = memref.load %arg2[%c12] : memref<98xf32, #tpu.memory_space<smem>>
    %c0_53 = arith.constant 0 : index
    %c1_54 = arith.constant 1 : index
    %c5_55 = arith.constant 5 : index
    %88 = vector.load %arg4[%c0_53, %c1_54, %c5_55] : memref<2x22x22xf32, #tpu.memory_space<vmem>>, vector<1x16x16xf32>
    %89 = vector.shape_cast %88 : vector<1x16x16xf32> to vector<16x16xf32>
    %90 = vector.broadcast %87 : f32 to vector<16x16xf32>
    %91 = arith.mulf %90, %89 : vector<16x16xf32>
    %92 = arith.addf %86, %91 : vector<16x16xf32>
    %c13 = arith.constant 13 : index
    %93 = memref.load %arg2[%c13] : memref<98xf32, #tpu.memory_space<smem>>
    %c0_56 = arith.constant 0 : index
    %c1_57 = arith.constant 1 : index
    %c6_58 = arith.constant 6 : index
    %94 = vector.load %arg4[%c0_56, %c1_57, %c6_58] : memref<2x22x22xf32, #tpu.memory_space<vmem>>, vector<1x16x16xf32>
    %95 = vector.shape_cast %94 : vector<1x16x16xf32> to vector<16x16xf32>
    %96 = vector.broadcast %93 : f32 to vector<16x16xf32>
    %97 = arith.mulf %96, %95 : vector<16x16xf32>
    %98 = arith.addf %92, %97 : vector<16x16xf32>
    %c14 = arith.constant 14 : index
    %99 = memref.load %arg2[%c14] : memref<98xf32, #tpu.memory_space<smem>>
    %c0_59 = arith.constant 0 : index
    %c2_60 = arith.constant 2 : index
    %c0_61 = arith.constant 0 : index
    %100 = vector.load %arg4[%c0_59, %c2_60, %c0_61] : memref<2x22x22xf32, #tpu.memory_space<vmem>>, vector<1x16x16xf32>
    %101 = vector.shape_cast %100 : vector<1x16x16xf32> to vector<16x16xf32>
    %102 = vector.broadcast %99 : f32 to vector<16x16xf32>
    %103 = arith.mulf %102, %101 : vector<16x16xf32>
    %104 = arith.addf %98, %103 : vector<16x16xf32>
    %c15 = arith.constant 15 : index
    %105 = memref.load %arg2[%c15] : memref<98xf32, #tpu.memory_space<smem>>
    %c0_62 = arith.constant 0 : index
    %c2_63 = arith.constant 2 : index
    %c1_64 = arith.constant 1 : index
    %106 = vector.load %arg4[%c0_62, %c2_63, %c1_64] : memref<2x22x22xf32, #tpu.memory_space<vmem>>, vector<1x16x16xf32>
    %107 = vector.shape_cast %106 : vector<1x16x16xf32> to vector<16x16xf32>
    %108 = vector.broadcast %105 : f32 to vector<16x16xf32>
    %109 = arith.mulf %108, %107 : vector<16x16xf32>
    %110 = arith.addf %104, %109 : vector<16x16xf32>
    %c16 = arith.constant 16 : index
    %111 = memref.load %arg2[%c16] : memref<98xf32, #tpu.memory_space<smem>>
    %c0_65 = arith.constant 0 : index
    %c2_66 = arith.constant 2 : index
    %c2_67 = arith.constant 2 : index
    %112 = vector.load %arg4[%c0_65, %c2_66, %c2_67] : memref<2x22x22xf32, #tpu.memory_space<vmem>>, vector<1x16x16xf32>
    %113 = vector.shape_cast %112 : vector<1x16x16xf32> to vector<16x16xf32>
    %114 = vector.broadcast %111 : f32 to vector<16x16xf32>
    %115 = arith.mulf %114, %113 : vector<16x16xf32>
    %116 = arith.addf %110, %115 : vector<16x16xf32>
    %c17 = arith.constant 17 : index
    %117 = memref.load %arg2[%c17] : memref<98xf32, #tpu.memory_space<smem>>
    %c0_68 = arith.constant 0 : index
    %c2_69 = arith.constant 2 : index
    %c3_70 = arith.constant 3 : index
    %118 = vector.load %arg4[%c0_68, %c2_69, %c3_70] : memref<2x22x22xf32, #tpu.memory_space<vmem>>, vector<1x16x16xf32>
    %119 = vector.shape_cast %118 : vector<1x16x16xf32> to vector<16x16xf32>
    %120 = vector.broadcast %117 : f32 to vector<16x16xf32>
    %121 = arith.mulf %120, %119 : vector<16x16xf32>
    %122 = arith.addf %116, %121 : vector<16x16xf32>
    %c18 = arith.constant 18 : index
    %123 = memref.load %arg2[%c18] : memref<98xf32, #tpu.memory_space<smem>>
    %c0_71 = arith.constant 0 : index
    %c2_72 = arith.constant 2 : index
    %c4_73 = arith.constant 4 : index
    %124 = vector.load %arg4[%c0_71, %c2_72, %c4_73] : memref<2x22x22xf32, #tpu.memory_space<vmem>>, vector<1x16x16xf32>
    %125 = vector.shape_cast %124 : vector<1x16x16xf32> to vector<16x16xf32>
    %126 = vector.broadcast %123 : f32 to vector<16x16xf32>
    %127 = arith.mulf %126, %125 : vector<16x16xf32>
    %128 = arith.addf %122, %127 : vector<16x16xf32>
    %c19 = arith.constant 19 : index
    %129 = memref.load %arg2[%c19] : memref<98xf32, #tpu.memory_space<smem>>
    %c0_74 = arith.constant 0 : index
    %c2_75 = arith.constant 2 : index
    %c5_76 = arith.constant 5 : index
    %130 = vector.load %arg4[%c0_74, %c2_75, %c5_76] : memref<2x22x22xf32, #tpu.memory_space<vmem>>, vector<1x16x16xf32>
    %131 = vector.shape_cast %130 : vector<1x16x16xf32> to vector<16x16xf32>
    %132 = vector.broadcast %129 : f32 to vector<16x16xf32>
    %133 = arith.mulf %132, %131 : vector<16x16xf32>
    %134 = arith.addf %128, %133 : vector<16x16xf32>
    %c20 = arith.constant 20 : index
    %135 = memref.load %arg2[%c20] : memref<98xf32, #tpu.memory_space<smem>>
    %c0_77 = arith.constant 0 : index
    %c2_78 = arith.constant 2 : index
    %c6_79 = arith.constant 6 : index
    %136 = vector.load %arg4[%c0_77, %c2_78, %c6_79] : memref<2x22x22xf32, #tpu.memory_space<vmem>>, vector<1x16x16xf32>
    %137 = vector.shape_cast %136 : vector<1x16x16xf32> to vector<16x16xf32>
    %138 = vector.broadcast %135 : f32 to vector<16x16xf32>
    %139 = arith.mulf %138, %137 : vector<16x16xf32>
    %140 = arith.addf %134, %139 : vector<16x16xf32>
    %c21 = arith.constant 21 : index
    %141 = memref.load %arg2[%c21] : memref<98xf32, #tpu.memory_space<smem>>
    %c0_80 = arith.constant 0 : index
    %c3_81 = arith.constant 3 : index
    %c0_82 = arith.constant 0 : index
    %142 = vector.load %arg4[%c0_80, %c3_81, %c0_82] : memref<2x22x22xf32, #tpu.memory_space<vmem>>, vector<1x16x16xf32>
    %143 = vector.shape_cast %142 : vector<1x16x16xf32> to vector<16x16xf32>
    %144 = vector.broadcast %141 : f32 to vector<16x16xf32>
    %145 = arith.mulf %144, %143 : vector<16x16xf32>
    %146 = arith.addf %140, %145 : vector<16x16xf32>
    %c22 = arith.constant 22 : index
    %147 = memref.load %arg2[%c22] : memref<98xf32, #tpu.memory_space<smem>>
    %c0_83 = arith.constant 0 : index
    %c3_84 = arith.constant 3 : index
    %c1_85 = arith.constant 1 : index
    %148 = vector.load %arg4[%c0_83, %c3_84, %c1_85] : memref<2x22x22xf32, #tpu.memory_space<vmem>>, vector<1x16x16xf32>
    %149 = vector.shape_cast %148 : vector<1x16x16xf32> to vector<16x16xf32>
    %150 = vector.broadcast %147 : f32 to vector<16x16xf32>
    %151 = arith.mulf %150, %149 : vector<16x16xf32>
    %152 = arith.addf %146, %151 : vector<16x16xf32>
    %c23 = arith.constant 23 : index
    %153 = memref.load %arg2[%c23] : memref<98xf32, #tpu.memory_space<smem>>
    %c0_86 = arith.constant 0 : index
    %c3_87 = arith.constant 3 : index
    %c2_88 = arith.constant 2 : index
    %154 = vector.load %arg4[%c0_86, %c3_87, %c2_88] : memref<2x22x22xf32, #tpu.memory_space<vmem>>, vector<1x16x16xf32>
    %155 = vector.shape_cast %154 : vector<1x16x16xf32> to vector<16x16xf32>
    %156 = vector.broadcast %153 : f32 to vector<16x16xf32>
    %157 = arith.mulf %156, %155 : vector<16x16xf32>
    %158 = arith.addf %152, %157 : vector<16x16xf32>
    %c24 = arith.constant 24 : index
    %159 = memref.load %arg2[%c24] : memref<98xf32, #tpu.memory_space<smem>>
    %c0_89 = arith.constant 0 : index
    %c3_90 = arith.constant 3 : index
    %c3_91 = arith.constant 3 : index
    %160 = vector.load %arg4[%c0_89, %c3_90, %c3_91] : memref<2x22x22xf32, #tpu.memory_space<vmem>>, vector<1x16x16xf32>
    %161 = vector.shape_cast %160 : vector<1x16x16xf32> to vector<16x16xf32>
    %162 = vector.broadcast %159 : f32 to vector<16x16xf32>
    %163 = arith.mulf %162, %161 : vector<16x16xf32>
    %164 = arith.addf %158, %163 : vector<16x16xf32>
    %c25 = arith.constant 25 : index
    %165 = memref.load %arg2[%c25] : memref<98xf32, #tpu.memory_space<smem>>
    %c0_92 = arith.constant 0 : index
    %c3_93 = arith.constant 3 : index
    %c4_94 = arith.constant 4 : index
    %166 = vector.load %arg4[%c0_92, %c3_93, %c4_94] : memref<2x22x22xf32, #tpu.memory_space<vmem>>, vector<1x16x16xf32>
    %167 = vector.shape_cast %166 : vector<1x16x16xf32> to vector<16x16xf32>
    %168 = vector.broadcast %165 : f32 to vector<16x16xf32>
    %169 = arith.mulf %168, %167 : vector<16x16xf32>
    %170 = arith.addf %164, %169 : vector<16x16xf32>
    %c26 = arith.constant 26 : index
    %171 = memref.load %arg2[%c26] : memref<98xf32, #tpu.memory_space<smem>>
    %c0_95 = arith.constant 0 : index
    %c3_96 = arith.constant 3 : index
    %c5_97 = arith.constant 5 : index
    %172 = vector.load %arg4[%c0_95, %c3_96, %c5_97] : memref<2x22x22xf32, #tpu.memory_space<vmem>>, vector<1x16x16xf32>
    %173 = vector.shape_cast %172 : vector<1x16x16xf32> to vector<16x16xf32>
    %174 = vector.broadcast %171 : f32 to vector<16x16xf32>
    %175 = arith.mulf %174, %173 : vector<16x16xf32>
    %176 = arith.addf %170, %175 : vector<16x16xf32>
    %c27 = arith.constant 27 : index
    %177 = memref.load %arg2[%c27] : memref<98xf32, #tpu.memory_space<smem>>
    %c0_98 = arith.constant 0 : index
    %c3_99 = arith.constant 3 : index
    %c6_100 = arith.constant 6 : index
    %178 = vector.load %arg4[%c0_98, %c3_99, %c6_100] : memref<2x22x22xf32, #tpu.memory_space<vmem>>, vector<1x16x16xf32>
    %179 = vector.shape_cast %178 : vector<1x16x16xf32> to vector<16x16xf32>
    %180 = vector.broadcast %177 : f32 to vector<16x16xf32>
    %181 = arith.mulf %180, %179 : vector<16x16xf32>
    %182 = arith.addf %176, %181 : vector<16x16xf32>
    %c28 = arith.constant 28 : index
    %183 = memref.load %arg2[%c28] : memref<98xf32, #tpu.memory_space<smem>>
    %c0_101 = arith.constant 0 : index
    %c4_102 = arith.constant 4 : index
    %c0_103 = arith.constant 0 : index
    %184 = vector.load %arg4[%c0_101, %c4_102, %c0_103] : memref<2x22x22xf32, #tpu.memory_space<vmem>>, vector<1x16x16xf32>
    %185 = vector.shape_cast %184 : vector<1x16x16xf32> to vector<16x16xf32>
    %186 = vector.broadcast %183 : f32 to vector<16x16xf32>
    %187 = arith.mulf %186, %185 : vector<16x16xf32>
    %188 = arith.addf %182, %187 : vector<16x16xf32>
    %c29 = arith.constant 29 : index
    %189 = memref.load %arg2[%c29] : memref<98xf32, #tpu.memory_space<smem>>
    %c0_104 = arith.constant 0 : index
    %c4_105 = arith.constant 4 : index
    %c1_106 = arith.constant 1 : index
    %190 = vector.load %arg4[%c0_104, %c4_105, %c1_106] : memref<2x22x22xf32, #tpu.memory_space<vmem>>, vector<1x16x16xf32>
    %191 = vector.shape_cast %190 : vector<1x16x16xf32> to vector<16x16xf32>
    %192 = vector.broadcast %189 : f32 to vector<16x16xf32>
    %193 = arith.mulf %192, %191 : vector<16x16xf32>
    %194 = arith.addf %188, %193 : vector<16x16xf32>
    %c30 = arith.constant 30 : index
    %195 = memref.load %arg2[%c30] : memref<98xf32, #tpu.memory_space<smem>>
    %c0_107 = arith.constant 0 : index
    %c4_108 = arith.constant 4 : index
    %c2_109 = arith.constant 2 : index
    %196 = vector.load %arg4[%c0_107, %c4_108, %c2_109] : memref<2x22x22xf32, #tpu.memory_space<vmem>>, vector<1x16x16xf32>
    %197 = vector.shape_cast %196 : vector<1x16x16xf32> to vector<16x16xf32>
    %198 = vector.broadcast %195 : f32 to vector<16x16xf32>
    %199 = arith.mulf %198, %197 : vector<16x16xf32>
    %200 = arith.addf %194, %199 : vector<16x16xf32>
    %c31 = arith.constant 31 : index
    %201 = memref.load %arg2[%c31] : memref<98xf32, #tpu.memory_space<smem>>
    %c0_110 = arith.constant 0 : index
    %c4_111 = arith.constant 4 : index
    %c3_112 = arith.constant 3 : index
    %202 = vector.load %arg4[%c0_110, %c4_111, %c3_112] : memref<2x22x22xf32, #tpu.memory_space<vmem>>, vector<1x16x16xf32>
    %203 = vector.shape_cast %202 : vector<1x16x16xf32> to vector<16x16xf32>
    %204 = vector.broadcast %201 : f32 to vector<16x16xf32>
    %205 = arith.mulf %204, %203 : vector<16x16xf32>
    %206 = arith.addf %200, %205 : vector<16x16xf32>
    %c32 = arith.constant 32 : index
    %207 = memref.load %arg2[%c32] : memref<98xf32, #tpu.memory_space<smem>>
    %c0_113 = arith.constant 0 : index
    %c4_114 = arith.constant 4 : index
    %c4_115 = arith.constant 4 : index
    %208 = vector.load %arg4[%c0_113, %c4_114, %c4_115] : memref<2x22x22xf32, #tpu.memory_space<vmem>>, vector<1x16x16xf32>
    %209 = vector.shape_cast %208 : vector<1x16x16xf32> to vector<16x16xf32>
    %210 = vector.broadcast %207 : f32 to vector<16x16xf32>
    %211 = arith.mulf %210, %209 : vector<16x16xf32>
    %212 = arith.addf %206, %211 : vector<16x16xf32>
    %c33 = arith.constant 33 : index
    %213 = memref.load %arg2[%c33] : memref<98xf32, #tpu.memory_space<smem>>
    %c0_116 = arith.constant 0 : index
    %c4_117 = arith.constant 4 : index
    %c5_118 = arith.constant 5 : index
    %214 = vector.load %arg4[%c0_116, %c4_117, %c5_118] : memref<2x22x22xf32, #tpu.memory_space<vmem>>, vector<1x16x16xf32>
    %215 = vector.shape_cast %214 : vector<1x16x16xf32> to vector<16x16xf32>
    %216 = vector.broadcast %213 : f32 to vector<16x16xf32>
    %217 = arith.mulf %216, %215 : vector<16x16xf32>
    %218 = arith.addf %212, %217 : vector<16x16xf32>
    %c34 = arith.constant 34 : index
    %219 = memref.load %arg2[%c34] : memref<98xf32, #tpu.memory_space<smem>>
    %c0_119 = arith.constant 0 : index
    %c4_120 = arith.constant 4 : index
    %c6_121 = arith.constant 6 : index
    %220 = vector.load %arg4[%c0_119, %c4_120, %c6_121] : memref<2x22x22xf32, #tpu.memory_space<vmem>>, vector<1x16x16xf32>
    %221 = vector.shape_cast %220 : vector<1x16x16xf32> to vector<16x16xf32>
    %222 = vector.broadcast %219 : f32 to vector<16x16xf32>
    %223 = arith.mulf %222, %221 : vector<16x16xf32>
    %224 = arith.addf %218, %223 : vector<16x16xf32>
    %c35 = arith.constant 35 : index
    %225 = memref.load %arg2[%c35] : memref<98xf32, #tpu.memory_space<smem>>
    %c0_122 = arith.constant 0 : index
    %c5_123 = arith.constant 5 : index
    %c0_124 = arith.constant 0 : index
    %226 = vector.load %arg4[%c0_122, %c5_123, %c0_124] : memref<2x22x22xf32, #tpu.memory_space<vmem>>, vector<1x16x16xf32>
    %227 = vector.shape_cast %226 : vector<1x16x16xf32> to vector<16x16xf32>
    %228 = vector.broadcast %225 : f32 to vector<16x16xf32>
    %229 = arith.mulf %228, %227 : vector<16x16xf32>
    %230 = arith.addf %224, %229 : vector<16x16xf32>
    %c36 = arith.constant 36 : index
    %231 = memref.load %arg2[%c36] : memref<98xf32, #tpu.memory_space<smem>>
    %c0_125 = arith.constant 0 : index
    %c5_126 = arith.constant 5 : index
    %c1_127 = arith.constant 1 : index
    %232 = vector.load %arg4[%c0_125, %c5_126, %c1_127] : memref<2x22x22xf32, #tpu.memory_space<vmem>>, vector<1x16x16xf32>
    %233 = vector.shape_cast %232 : vector<1x16x16xf32> to vector<16x16xf32>
    %234 = vector.broadcast %231 : f32 to vector<16x16xf32>
    %235 = arith.mulf %234, %233 : vector<16x16xf32>
    %236 = arith.addf %230, %235 : vector<16x16xf32>
    %c37 = arith.constant 37 : index
    %237 = memref.load %arg2[%c37] : memref<98xf32, #tpu.memory_space<smem>>
    %c0_128 = arith.constant 0 : index
    %c5_129 = arith.constant 5 : index
    %c2_130 = arith.constant 2 : index
    %238 = vector.load %arg4[%c0_128, %c5_129, %c2_130] : memref<2x22x22xf32, #tpu.memory_space<vmem>>, vector<1x16x16xf32>
    %239 = vector.shape_cast %238 : vector<1x16x16xf32> to vector<16x16xf32>
    %240 = vector.broadcast %237 : f32 to vector<16x16xf32>
    %241 = arith.mulf %240, %239 : vector<16x16xf32>
    %242 = arith.addf %236, %241 : vector<16x16xf32>
    %c38 = arith.constant 38 : index
    %243 = memref.load %arg2[%c38] : memref<98xf32, #tpu.memory_space<smem>>
    %c0_131 = arith.constant 0 : index
    %c5_132 = arith.constant 5 : index
    %c3_133 = arith.constant 3 : index
    %244 = vector.load %arg4[%c0_131, %c5_132, %c3_133] : memref<2x22x22xf32, #tpu.memory_space<vmem>>, vector<1x16x16xf32>
    %245 = vector.shape_cast %244 : vector<1x16x16xf32> to vector<16x16xf32>
    %246 = vector.broadcast %243 : f32 to vector<16x16xf32>
    %247 = arith.mulf %246, %245 : vector<16x16xf32>
    %248 = arith.addf %242, %247 : vector<16x16xf32>
    %c39 = arith.constant 39 : index
    %249 = memref.load %arg2[%c39] : memref<98xf32, #tpu.memory_space<smem>>
    %c0_134 = arith.constant 0 : index
    %c5_135 = arith.constant 5 : index
    %c4_136 = arith.constant 4 : index
    %250 = vector.load %arg4[%c0_134, %c5_135, %c4_136] : memref<2x22x22xf32, #tpu.memory_space<vmem>>, vector<1x16x16xf32>
    %251 = vector.shape_cast %250 : vector<1x16x16xf32> to vector<16x16xf32>
    %252 = vector.broadcast %249 : f32 to vector<16x16xf32>
    %253 = arith.mulf %252, %251 : vector<16x16xf32>
    %254 = arith.addf %248, %253 : vector<16x16xf32>
    %c40 = arith.constant 40 : index
    %255 = memref.load %arg2[%c40] : memref<98xf32, #tpu.memory_space<smem>>
    %c0_137 = arith.constant 0 : index
    %c5_138 = arith.constant 5 : index
    %c5_139 = arith.constant 5 : index
    %256 = vector.load %arg4[%c0_137, %c5_138, %c5_139] : memref<2x22x22xf32, #tpu.memory_space<vmem>>, vector<1x16x16xf32>
    %257 = vector.shape_cast %256 : vector<1x16x16xf32> to vector<16x16xf32>
    %258 = vector.broadcast %255 : f32 to vector<16x16xf32>
    %259 = arith.mulf %258, %257 : vector<16x16xf32>
    %260 = arith.addf %254, %259 : vector<16x16xf32>
    %c41 = arith.constant 41 : index
    %261 = memref.load %arg2[%c41] : memref<98xf32, #tpu.memory_space<smem>>
    %c0_140 = arith.constant 0 : index
    %c5_141 = arith.constant 5 : index
    %c6_142 = arith.constant 6 : index
    %262 = vector.load %arg4[%c0_140, %c5_141, %c6_142] : memref<2x22x22xf32, #tpu.memory_space<vmem>>, vector<1x16x16xf32>
    %263 = vector.shape_cast %262 : vector<1x16x16xf32> to vector<16x16xf32>
    %264 = vector.broadcast %261 : f32 to vector<16x16xf32>
    %265 = arith.mulf %264, %263 : vector<16x16xf32>
    %266 = arith.addf %260, %265 : vector<16x16xf32>
    %c42 = arith.constant 42 : index
    %267 = memref.load %arg2[%c42] : memref<98xf32, #tpu.memory_space<smem>>
    %c0_143 = arith.constant 0 : index
    %c6_144 = arith.constant 6 : index
    %c0_145 = arith.constant 0 : index
    %268 = vector.load %arg4[%c0_143, %c6_144, %c0_145] : memref<2x22x22xf32, #tpu.memory_space<vmem>>, vector<1x16x16xf32>
    %269 = vector.shape_cast %268 : vector<1x16x16xf32> to vector<16x16xf32>
    %270 = vector.broadcast %267 : f32 to vector<16x16xf32>
    %271 = arith.mulf %270, %269 : vector<16x16xf32>
    %272 = arith.addf %266, %271 : vector<16x16xf32>
    %c43 = arith.constant 43 : index
    %273 = memref.load %arg2[%c43] : memref<98xf32, #tpu.memory_space<smem>>
    %c0_146 = arith.constant 0 : index
    %c6_147 = arith.constant 6 : index
    %c1_148 = arith.constant 1 : index
    %274 = vector.load %arg4[%c0_146, %c6_147, %c1_148] : memref<2x22x22xf32, #tpu.memory_space<vmem>>, vector<1x16x16xf32>
    %275 = vector.shape_cast %274 : vector<1x16x16xf32> to vector<16x16xf32>
    %276 = vector.broadcast %273 : f32 to vector<16x16xf32>
    %277 = arith.mulf %276, %275 : vector<16x16xf32>
    %278 = arith.addf %272, %277 : vector<16x16xf32>
    %c44 = arith.constant 44 : index
    %279 = memref.load %arg2[%c44] : memref<98xf32, #tpu.memory_space<smem>>
    %c0_149 = arith.constant 0 : index
    %c6_150 = arith.constant 6 : index
    %c2_151 = arith.constant 2 : index
    %280 = vector.load %arg4[%c0_149, %c6_150, %c2_151] : memref<2x22x22xf32, #tpu.memory_space<vmem>>, vector<1x16x16xf32>
    %281 = vector.shape_cast %280 : vector<1x16x16xf32> to vector<16x16xf32>
    %282 = vector.broadcast %279 : f32 to vector<16x16xf32>
    %283 = arith.mulf %282, %281 : vector<16x16xf32>
    %284 = arith.addf %278, %283 : vector<16x16xf32>
    %c45 = arith.constant 45 : index
    %285 = memref.load %arg2[%c45] : memref<98xf32, #tpu.memory_space<smem>>
    %c0_152 = arith.constant 0 : index
    %c6_153 = arith.constant 6 : index
    %c3_154 = arith.constant 3 : index
    %286 = vector.load %arg4[%c0_152, %c6_153, %c3_154] : memref<2x22x22xf32, #tpu.memory_space<vmem>>, vector<1x16x16xf32>
    %287 = vector.shape_cast %286 : vector<1x16x16xf32> to vector<16x16xf32>
    %288 = vector.broadcast %285 : f32 to vector<16x16xf32>
    %289 = arith.mulf %288, %287 : vector<16x16xf32>
    %290 = arith.addf %284, %289 : vector<16x16xf32>
    %c46 = arith.constant 46 : index
    %291 = memref.load %arg2[%c46] : memref<98xf32, #tpu.memory_space<smem>>
    %c0_155 = arith.constant 0 : index
    %c6_156 = arith.constant 6 : index
    %c4_157 = arith.constant 4 : index
    %292 = vector.load %arg4[%c0_155, %c6_156, %c4_157] : memref<2x22x22xf32, #tpu.memory_space<vmem>>, vector<1x16x16xf32>
    %293 = vector.shape_cast %292 : vector<1x16x16xf32> to vector<16x16xf32>
    %294 = vector.broadcast %291 : f32 to vector<16x16xf32>
    %295 = arith.mulf %294, %293 : vector<16x16xf32>
    %296 = arith.addf %290, %295 : vector<16x16xf32>
    %c47 = arith.constant 47 : index
    %297 = memref.load %arg2[%c47] : memref<98xf32, #tpu.memory_space<smem>>
    %c0_158 = arith.constant 0 : index
    %c6_159 = arith.constant 6 : index
    %c5_160 = arith.constant 5 : index
    %298 = vector.load %arg4[%c0_158, %c6_159, %c5_160] : memref<2x22x22xf32, #tpu.memory_space<vmem>>, vector<1x16x16xf32>
    %299 = vector.shape_cast %298 : vector<1x16x16xf32> to vector<16x16xf32>
    %300 = vector.broadcast %297 : f32 to vector<16x16xf32>
    %301 = arith.mulf %300, %299 : vector<16x16xf32>
    %302 = arith.addf %296, %301 : vector<16x16xf32>
    %c48 = arith.constant 48 : index
    %303 = memref.load %arg2[%c48] : memref<98xf32, #tpu.memory_space<smem>>
    %c0_161 = arith.constant 0 : index
    %c6_162 = arith.constant 6 : index
    %c6_163 = arith.constant 6 : index
    %304 = vector.load %arg4[%c0_161, %c6_162, %c6_163] : memref<2x22x22xf32, #tpu.memory_space<vmem>>, vector<1x16x16xf32>
    %305 = vector.shape_cast %304 : vector<1x16x16xf32> to vector<16x16xf32>
    %306 = vector.broadcast %303 : f32 to vector<16x16xf32>
    %307 = arith.mulf %306, %305 : vector<16x16xf32>
    %308 = arith.addf %302, %307 : vector<16x16xf32>
    %c49 = arith.constant 49 : index
    %309 = memref.load %arg2[%c49] : memref<98xf32, #tpu.memory_space<smem>>
    %c1_164 = arith.constant 1 : index
    %c0_165 = arith.constant 0 : index
    %c0_166 = arith.constant 0 : index
    %310 = vector.load %arg4[%c1_164, %c0_165, %c0_166] : memref<2x22x22xf32, #tpu.memory_space<vmem>>, vector<1x16x16xf32>
    %311 = vector.shape_cast %310 : vector<1x16x16xf32> to vector<16x16xf32>
    %312 = vector.broadcast %309 : f32 to vector<16x16xf32>
    %313 = arith.mulf %312, %311 : vector<16x16xf32>
    %314 = arith.addf %308, %313 : vector<16x16xf32>
    %c50 = arith.constant 50 : index
    %315 = memref.load %arg2[%c50] : memref<98xf32, #tpu.memory_space<smem>>
    %c1_167 = arith.constant 1 : index
    %c0_168 = arith.constant 0 : index
    %c1_169 = arith.constant 1 : index
    %316 = vector.load %arg4[%c1_167, %c0_168, %c1_169] : memref<2x22x22xf32, #tpu.memory_space<vmem>>, vector<1x16x16xf32>
    %317 = vector.shape_cast %316 : vector<1x16x16xf32> to vector<16x16xf32>
    %318 = vector.broadcast %315 : f32 to vector<16x16xf32>
    %319 = arith.mulf %318, %317 : vector<16x16xf32>
    %320 = arith.addf %314, %319 : vector<16x16xf32>
    %c51 = arith.constant 51 : index
    %321 = memref.load %arg2[%c51] : memref<98xf32, #tpu.memory_space<smem>>
    %c1_170 = arith.constant 1 : index
    %c0_171 = arith.constant 0 : index
    %c2_172 = arith.constant 2 : index
    %322 = vector.load %arg4[%c1_170, %c0_171, %c2_172] : memref<2x22x22xf32, #tpu.memory_space<vmem>>, vector<1x16x16xf32>
    %323 = vector.shape_cast %322 : vector<1x16x16xf32> to vector<16x16xf32>
    %324 = vector.broadcast %321 : f32 to vector<16x16xf32>
    %325 = arith.mulf %324, %323 : vector<16x16xf32>
    %326 = arith.addf %320, %325 : vector<16x16xf32>
    %c52 = arith.constant 52 : index
    %327 = memref.load %arg2[%c52] : memref<98xf32, #tpu.memory_space<smem>>
    %c1_173 = arith.constant 1 : index
    %c0_174 = arith.constant 0 : index
    %c3_175 = arith.constant 3 : index
    %328 = vector.load %arg4[%c1_173, %c0_174, %c3_175] : memref<2x22x22xf32, #tpu.memory_space<vmem>>, vector<1x16x16xf32>
    %329 = vector.shape_cast %328 : vector<1x16x16xf32> to vector<16x16xf32>
    %330 = vector.broadcast %327 : f32 to vector<16x16xf32>
    %331 = arith.mulf %330, %329 : vector<16x16xf32>
    %332 = arith.addf %326, %331 : vector<16x16xf32>
    %c53 = arith.constant 53 : index
    %333 = memref.load %arg2[%c53] : memref<98xf32, #tpu.memory_space<smem>>
    %c1_176 = arith.constant 1 : index
    %c0_177 = arith.constant 0 : index
    %c4_178 = arith.constant 4 : index
    %334 = vector.load %arg4[%c1_176, %c0_177, %c4_178] : memref<2x22x22xf32, #tpu.memory_space<vmem>>, vector<1x16x16xf32>
    %335 = vector.shape_cast %334 : vector<1x16x16xf32> to vector<16x16xf32>
    %336 = vector.broadcast %333 : f32 to vector<16x16xf32>
    %337 = arith.mulf %336, %335 : vector<16x16xf32>
    %338 = arith.addf %332, %337 : vector<16x16xf32>
    %c54 = arith.constant 54 : index
    %339 = memref.load %arg2[%c54] : memref<98xf32, #tpu.memory_space<smem>>
    %c1_179 = arith.constant 1 : index
    %c0_180 = arith.constant 0 : index
    %c5_181 = arith.constant 5 : index
    %340 = vector.load %arg4[%c1_179, %c0_180, %c5_181] : memref<2x22x22xf32, #tpu.memory_space<vmem>>, vector<1x16x16xf32>
    %341 = vector.shape_cast %340 : vector<1x16x16xf32> to vector<16x16xf32>
    %342 = vector.broadcast %339 : f32 to vector<16x16xf32>
    %343 = arith.mulf %342, %341 : vector<16x16xf32>
    %344 = arith.addf %338, %343 : vector<16x16xf32>
    %c55 = arith.constant 55 : index
    %345 = memref.load %arg2[%c55] : memref<98xf32, #tpu.memory_space<smem>>
    %c1_182 = arith.constant 1 : index
    %c0_183 = arith.constant 0 : index
    %c6_184 = arith.constant 6 : index
    %346 = vector.load %arg4[%c1_182, %c0_183, %c6_184] : memref<2x22x22xf32, #tpu.memory_space<vmem>>, vector<1x16x16xf32>
    %347 = vector.shape_cast %346 : vector<1x16x16xf32> to vector<16x16xf32>
    %348 = vector.broadcast %345 : f32 to vector<16x16xf32>
    %349 = arith.mulf %348, %347 : vector<16x16xf32>
    %350 = arith.addf %344, %349 : vector<16x16xf32>
    %c56 = arith.constant 56 : index
    %351 = memref.load %arg2[%c56] : memref<98xf32, #tpu.memory_space<smem>>
    %c1_185 = arith.constant 1 : index
    %c1_186 = arith.constant 1 : index
    %c0_187 = arith.constant 0 : index
    %352 = vector.load %arg4[%c1_185, %c1_186, %c0_187] : memref<2x22x22xf32, #tpu.memory_space<vmem>>, vector<1x16x16xf32>
    %353 = vector.shape_cast %352 : vector<1x16x16xf32> to vector<16x16xf32>
    %354 = vector.broadcast %351 : f32 to vector<16x16xf32>
    %355 = arith.mulf %354, %353 : vector<16x16xf32>
    %356 = arith.addf %350, %355 : vector<16x16xf32>
    %c57 = arith.constant 57 : index
    %357 = memref.load %arg2[%c57] : memref<98xf32, #tpu.memory_space<smem>>
    %c1_188 = arith.constant 1 : index
    %c1_189 = arith.constant 1 : index
    %c1_190 = arith.constant 1 : index
    %358 = vector.load %arg4[%c1_188, %c1_189, %c1_190] : memref<2x22x22xf32, #tpu.memory_space<vmem>>, vector<1x16x16xf32>
    %359 = vector.shape_cast %358 : vector<1x16x16xf32> to vector<16x16xf32>
    %360 = vector.broadcast %357 : f32 to vector<16x16xf32>
    %361 = arith.mulf %360, %359 : vector<16x16xf32>
    %362 = arith.addf %356, %361 : vector<16x16xf32>
    %c58 = arith.constant 58 : index
    %363 = memref.load %arg2[%c58] : memref<98xf32, #tpu.memory_space<smem>>
    %c1_191 = arith.constant 1 : index
    %c1_192 = arith.constant 1 : index
    %c2_193 = arith.constant 2 : index
    %364 = vector.load %arg4[%c1_191, %c1_192, %c2_193] : memref<2x22x22xf32, #tpu.memory_space<vmem>>, vector<1x16x16xf32>
    %365 = vector.shape_cast %364 : vector<1x16x16xf32> to vector<16x16xf32>
    %366 = vector.broadcast %363 : f32 to vector<16x16xf32>
    %367 = arith.mulf %366, %365 : vector<16x16xf32>
    %368 = arith.addf %362, %367 : vector<16x16xf32>
    %c59 = arith.constant 59 : index
    %369 = memref.load %arg2[%c59] : memref<98xf32, #tpu.memory_space<smem>>
    %c1_194 = arith.constant 1 : index
    %c1_195 = arith.constant 1 : index
    %c3_196 = arith.constant 3 : index
    %370 = vector.load %arg4[%c1_194, %c1_195, %c3_196] : memref<2x22x22xf32, #tpu.memory_space<vmem>>, vector<1x16x16xf32>
    %371 = vector.shape_cast %370 : vector<1x16x16xf32> to vector<16x16xf32>
    %372 = vector.broadcast %369 : f32 to vector<16x16xf32>
    %373 = arith.mulf %372, %371 : vector<16x16xf32>
    %374 = arith.addf %368, %373 : vector<16x16xf32>
    %c60 = arith.constant 60 : index
    %375 = memref.load %arg2[%c60] : memref<98xf32, #tpu.memory_space<smem>>
    %c1_197 = arith.constant 1 : index
    %c1_198 = arith.constant 1 : index
    %c4_199 = arith.constant 4 : index
    %376 = vector.load %arg4[%c1_197, %c1_198, %c4_199] : memref<2x22x22xf32, #tpu.memory_space<vmem>>, vector<1x16x16xf32>
    %377 = vector.shape_cast %376 : vector<1x16x16xf32> to vector<16x16xf32>
    %378 = vector.broadcast %375 : f32 to vector<16x16xf32>
    %379 = arith.mulf %378, %377 : vector<16x16xf32>
    %380 = arith.addf %374, %379 : vector<16x16xf32>
    %c61 = arith.constant 61 : index
    %381 = memref.load %arg2[%c61] : memref<98xf32, #tpu.memory_space<smem>>
    %c1_200 = arith.constant 1 : index
    %c1_201 = arith.constant 1 : index
    %c5_202 = arith.constant 5 : index
    %382 = vector.load %arg4[%c1_200, %c1_201, %c5_202] : memref<2x22x22xf32, #tpu.memory_space<vmem>>, vector<1x16x16xf32>
    %383 = vector.shape_cast %382 : vector<1x16x16xf32> to vector<16x16xf32>
    %384 = vector.broadcast %381 : f32 to vector<16x16xf32>
    %385 = arith.mulf %384, %383 : vector<16x16xf32>
    %386 = arith.addf %380, %385 : vector<16x16xf32>
    %c62 = arith.constant 62 : index
    %387 = memref.load %arg2[%c62] : memref<98xf32, #tpu.memory_space<smem>>
    %c1_203 = arith.constant 1 : index
    %c1_204 = arith.constant 1 : index
    %c6_205 = arith.constant 6 : index
    %388 = vector.load %arg4[%c1_203, %c1_204, %c6_205] : memref<2x22x22xf32, #tpu.memory_space<vmem>>, vector<1x16x16xf32>
    %389 = vector.shape_cast %388 : vector<1x16x16xf32> to vector<16x16xf32>
    %390 = vector.broadcast %387 : f32 to vector<16x16xf32>
    %391 = arith.mulf %390, %389 : vector<16x16xf32>
    %392 = arith.addf %386, %391 : vector<16x16xf32>
    %c63 = arith.constant 63 : index
    %393 = memref.load %arg2[%c63] : memref<98xf32, #tpu.memory_space<smem>>
    %c1_206 = arith.constant 1 : index
    %c2_207 = arith.constant 2 : index
    %c0_208 = arith.constant 0 : index
    %394 = vector.load %arg4[%c1_206, %c2_207, %c0_208] : memref<2x22x22xf32, #tpu.memory_space<vmem>>, vector<1x16x16xf32>
    %395 = vector.shape_cast %394 : vector<1x16x16xf32> to vector<16x16xf32>
    %396 = vector.broadcast %393 : f32 to vector<16x16xf32>
    %397 = arith.mulf %396, %395 : vector<16x16xf32>
    %398 = arith.addf %392, %397 : vector<16x16xf32>
    %c64 = arith.constant 64 : index
    %399 = memref.load %arg2[%c64] : memref<98xf32, #tpu.memory_space<smem>>
    %c1_209 = arith.constant 1 : index
    %c2_210 = arith.constant 2 : index
    %c1_211 = arith.constant 1 : index
    %400 = vector.load %arg4[%c1_209, %c2_210, %c1_211] : memref<2x22x22xf32, #tpu.memory_space<vmem>>, vector<1x16x16xf32>
    %401 = vector.shape_cast %400 : vector<1x16x16xf32> to vector<16x16xf32>
    %402 = vector.broadcast %399 : f32 to vector<16x16xf32>
    %403 = arith.mulf %402, %401 : vector<16x16xf32>
    %404 = arith.addf %398, %403 : vector<16x16xf32>
    %c65 = arith.constant 65 : index
    %405 = memref.load %arg2[%c65] : memref<98xf32, #tpu.memory_space<smem>>
    %c1_212 = arith.constant 1 : index
    %c2_213 = arith.constant 2 : index
    %c2_214 = arith.constant 2 : index
    %406 = vector.load %arg4[%c1_212, %c2_213, %c2_214] : memref<2x22x22xf32, #tpu.memory_space<vmem>>, vector<1x16x16xf32>
    %407 = vector.shape_cast %406 : vector<1x16x16xf32> to vector<16x16xf32>
    %408 = vector.broadcast %405 : f32 to vector<16x16xf32>
    %409 = arith.mulf %408, %407 : vector<16x16xf32>
    %410 = arith.addf %404, %409 : vector<16x16xf32>
    %c66 = arith.constant 66 : index
    %411 = memref.load %arg2[%c66] : memref<98xf32, #tpu.memory_space<smem>>
    %c1_215 = arith.constant 1 : index
    %c2_216 = arith.constant 2 : index
    %c3_217 = arith.constant 3 : index
    %412 = vector.load %arg4[%c1_215, %c2_216, %c3_217] : memref<2x22x22xf32, #tpu.memory_space<vmem>>, vector<1x16x16xf32>
    %413 = vector.shape_cast %412 : vector<1x16x16xf32> to vector<16x16xf32>
    %414 = vector.broadcast %411 : f32 to vector<16x16xf32>
    %415 = arith.mulf %414, %413 : vector<16x16xf32>
    %416 = arith.addf %410, %415 : vector<16x16xf32>
    %c67 = arith.constant 67 : index
    %417 = memref.load %arg2[%c67] : memref<98xf32, #tpu.memory_space<smem>>
    %c1_218 = arith.constant 1 : index
    %c2_219 = arith.constant 2 : index
    %c4_220 = arith.constant 4 : index
    %418 = vector.load %arg4[%c1_218, %c2_219, %c4_220] : memref<2x22x22xf32, #tpu.memory_space<vmem>>, vector<1x16x16xf32>
    %419 = vector.shape_cast %418 : vector<1x16x16xf32> to vector<16x16xf32>
    %420 = vector.broadcast %417 : f32 to vector<16x16xf32>
    %421 = arith.mulf %420, %419 : vector<16x16xf32>
    %422 = arith.addf %416, %421 : vector<16x16xf32>
    %c68 = arith.constant 68 : index
    %423 = memref.load %arg2[%c68] : memref<98xf32, #tpu.memory_space<smem>>
    %c1_221 = arith.constant 1 : index
    %c2_222 = arith.constant 2 : index
    %c5_223 = arith.constant 5 : index
    %424 = vector.load %arg4[%c1_221, %c2_222, %c5_223] : memref<2x22x22xf32, #tpu.memory_space<vmem>>, vector<1x16x16xf32>
    %425 = vector.shape_cast %424 : vector<1x16x16xf32> to vector<16x16xf32>
    %426 = vector.broadcast %423 : f32 to vector<16x16xf32>
    %427 = arith.mulf %426, %425 : vector<16x16xf32>
    %428 = arith.addf %422, %427 : vector<16x16xf32>
    %c69 = arith.constant 69 : index
    %429 = memref.load %arg2[%c69] : memref<98xf32, #tpu.memory_space<smem>>
    %c1_224 = arith.constant 1 : index
    %c2_225 = arith.constant 2 : index
    %c6_226 = arith.constant 6 : index
    %430 = vector.load %arg4[%c1_224, %c2_225, %c6_226] : memref<2x22x22xf32, #tpu.memory_space<vmem>>, vector<1x16x16xf32>
    %431 = vector.shape_cast %430 : vector<1x16x16xf32> to vector<16x16xf32>
    %432 = vector.broadcast %429 : f32 to vector<16x16xf32>
    %433 = arith.mulf %432, %431 : vector<16x16xf32>
    %434 = arith.addf %428, %433 : vector<16x16xf32>
    %c70 = arith.constant 70 : index
    %435 = memref.load %arg2[%c70] : memref<98xf32, #tpu.memory_space<smem>>
    %c1_227 = arith.constant 1 : index
    %c3_228 = arith.constant 3 : index
    %c0_229 = arith.constant 0 : index
    %436 = vector.load %arg4[%c1_227, %c3_228, %c0_229] : memref<2x22x22xf32, #tpu.memory_space<vmem>>, vector<1x16x16xf32>
    %437 = vector.shape_cast %436 : vector<1x16x16xf32> to vector<16x16xf32>
    %438 = vector.broadcast %435 : f32 to vector<16x16xf32>
    %439 = arith.mulf %438, %437 : vector<16x16xf32>
    %440 = arith.addf %434, %439 : vector<16x16xf32>
    %c71 = arith.constant 71 : index
    %441 = memref.load %arg2[%c71] : memref<98xf32, #tpu.memory_space<smem>>
    %c1_230 = arith.constant 1 : index
    %c3_231 = arith.constant 3 : index
    %c1_232 = arith.constant 1 : index
    %442 = vector.load %arg4[%c1_230, %c3_231, %c1_232] : memref<2x22x22xf32, #tpu.memory_space<vmem>>, vector<1x16x16xf32>
    %443 = vector.shape_cast %442 : vector<1x16x16xf32> to vector<16x16xf32>
    %444 = vector.broadcast %441 : f32 to vector<16x16xf32>
    %445 = arith.mulf %444, %443 : vector<16x16xf32>
    %446 = arith.addf %440, %445 : vector<16x16xf32>
    %c72 = arith.constant 72 : index
    %447 = memref.load %arg2[%c72] : memref<98xf32, #tpu.memory_space<smem>>
    %c1_233 = arith.constant 1 : index
    %c3_234 = arith.constant 3 : index
    %c2_235 = arith.constant 2 : index
    %448 = vector.load %arg4[%c1_233, %c3_234, %c2_235] : memref<2x22x22xf32, #tpu.memory_space<vmem>>, vector<1x16x16xf32>
    %449 = vector.shape_cast %448 : vector<1x16x16xf32> to vector<16x16xf32>
    %450 = vector.broadcast %447 : f32 to vector<16x16xf32>
    %451 = arith.mulf %450, %449 : vector<16x16xf32>
    %452 = arith.addf %446, %451 : vector<16x16xf32>
    %c73 = arith.constant 73 : index
    %453 = memref.load %arg2[%c73] : memref<98xf32, #tpu.memory_space<smem>>
    %c1_236 = arith.constant 1 : index
    %c3_237 = arith.constant 3 : index
    %c3_238 = arith.constant 3 : index
    %454 = vector.load %arg4[%c1_236, %c3_237, %c3_238] : memref<2x22x22xf32, #tpu.memory_space<vmem>>, vector<1x16x16xf32>
    %455 = vector.shape_cast %454 : vector<1x16x16xf32> to vector<16x16xf32>
    %456 = vector.broadcast %453 : f32 to vector<16x16xf32>
    %457 = arith.mulf %456, %455 : vector<16x16xf32>
    %458 = arith.addf %452, %457 : vector<16x16xf32>
    %c74 = arith.constant 74 : index
    %459 = memref.load %arg2[%c74] : memref<98xf32, #tpu.memory_space<smem>>
    %c1_239 = arith.constant 1 : index
    %c3_240 = arith.constant 3 : index
    %c4_241 = arith.constant 4 : index
    %460 = vector.load %arg4[%c1_239, %c3_240, %c4_241] : memref<2x22x22xf32, #tpu.memory_space<vmem>>, vector<1x16x16xf32>
    %461 = vector.shape_cast %460 : vector<1x16x16xf32> to vector<16x16xf32>
    %462 = vector.broadcast %459 : f32 to vector<16x16xf32>
    %463 = arith.mulf %462, %461 : vector<16x16xf32>
    %464 = arith.addf %458, %463 : vector<16x16xf32>
    %c75 = arith.constant 75 : index
    %465 = memref.load %arg2[%c75] : memref<98xf32, #tpu.memory_space<smem>>
    %c1_242 = arith.constant 1 : index
    %c3_243 = arith.constant 3 : index
    %c5_244 = arith.constant 5 : index
    %466 = vector.load %arg4[%c1_242, %c3_243, %c5_244] : memref<2x22x22xf32, #tpu.memory_space<vmem>>, vector<1x16x16xf32>
    %467 = vector.shape_cast %466 : vector<1x16x16xf32> to vector<16x16xf32>
    %468 = vector.broadcast %465 : f32 to vector<16x16xf32>
    %469 = arith.mulf %468, %467 : vector<16x16xf32>
    %470 = arith.addf %464, %469 : vector<16x16xf32>
    %c76 = arith.constant 76 : index
    %471 = memref.load %arg2[%c76] : memref<98xf32, #tpu.memory_space<smem>>
    %c1_245 = arith.constant 1 : index
    %c3_246 = arith.constant 3 : index
    %c6_247 = arith.constant 6 : index
    %472 = vector.load %arg4[%c1_245, %c3_246, %c6_247] : memref<2x22x22xf32, #tpu.memory_space<vmem>>, vector<1x16x16xf32>
    %473 = vector.shape_cast %472 : vector<1x16x16xf32> to vector<16x16xf32>
    %474 = vector.broadcast %471 : f32 to vector<16x16xf32>
    %475 = arith.mulf %474, %473 : vector<16x16xf32>
    %476 = arith.addf %470, %475 : vector<16x16xf32>
    %c77 = arith.constant 77 : index
    %477 = memref.load %arg2[%c77] : memref<98xf32, #tpu.memory_space<smem>>
    %c1_248 = arith.constant 1 : index
    %c4_249 = arith.constant 4 : index
    %c0_250 = arith.constant 0 : index
    %478 = vector.load %arg4[%c1_248, %c4_249, %c0_250] : memref<2x22x22xf32, #tpu.memory_space<vmem>>, vector<1x16x16xf32>
    %479 = vector.shape_cast %478 : vector<1x16x16xf32> to vector<16x16xf32>
    %480 = vector.broadcast %477 : f32 to vector<16x16xf32>
    %481 = arith.mulf %480, %479 : vector<16x16xf32>
    %482 = arith.addf %476, %481 : vector<16x16xf32>
    %c78 = arith.constant 78 : index
    %483 = memref.load %arg2[%c78] : memref<98xf32, #tpu.memory_space<smem>>
    %c1_251 = arith.constant 1 : index
    %c4_252 = arith.constant 4 : index
    %c1_253 = arith.constant 1 : index
    %484 = vector.load %arg4[%c1_251, %c4_252, %c1_253] : memref<2x22x22xf32, #tpu.memory_space<vmem>>, vector<1x16x16xf32>
    %485 = vector.shape_cast %484 : vector<1x16x16xf32> to vector<16x16xf32>
    %486 = vector.broadcast %483 : f32 to vector<16x16xf32>
    %487 = arith.mulf %486, %485 : vector<16x16xf32>
    %488 = arith.addf %482, %487 : vector<16x16xf32>
    %c79 = arith.constant 79 : index
    %489 = memref.load %arg2[%c79] : memref<98xf32, #tpu.memory_space<smem>>
    %c1_254 = arith.constant 1 : index
    %c4_255 = arith.constant 4 : index
    %c2_256 = arith.constant 2 : index
    %490 = vector.load %arg4[%c1_254, %c4_255, %c2_256] : memref<2x22x22xf32, #tpu.memory_space<vmem>>, vector<1x16x16xf32>
    %491 = vector.shape_cast %490 : vector<1x16x16xf32> to vector<16x16xf32>
    %492 = vector.broadcast %489 : f32 to vector<16x16xf32>
    %493 = arith.mulf %492, %491 : vector<16x16xf32>
    %494 = arith.addf %488, %493 : vector<16x16xf32>
    %c80 = arith.constant 80 : index
    %495 = memref.load %arg2[%c80] : memref<98xf32, #tpu.memory_space<smem>>
    %c1_257 = arith.constant 1 : index
    %c4_258 = arith.constant 4 : index
    %c3_259 = arith.constant 3 : index
    %496 = vector.load %arg4[%c1_257, %c4_258, %c3_259] : memref<2x22x22xf32, #tpu.memory_space<vmem>>, vector<1x16x16xf32>
    %497 = vector.shape_cast %496 : vector<1x16x16xf32> to vector<16x16xf32>
    %498 = vector.broadcast %495 : f32 to vector<16x16xf32>
    %499 = arith.mulf %498, %497 : vector<16x16xf32>
    %500 = arith.addf %494, %499 : vector<16x16xf32>
    %c81 = arith.constant 81 : index
    %501 = memref.load %arg2[%c81] : memref<98xf32, #tpu.memory_space<smem>>
    %c1_260 = arith.constant 1 : index
    %c4_261 = arith.constant 4 : index
    %c4_262 = arith.constant 4 : index
    %502 = vector.load %arg4[%c1_260, %c4_261, %c4_262] : memref<2x22x22xf32, #tpu.memory_space<vmem>>, vector<1x16x16xf32>
    %503 = vector.shape_cast %502 : vector<1x16x16xf32> to vector<16x16xf32>
    %504 = vector.broadcast %501 : f32 to vector<16x16xf32>
    %505 = arith.mulf %504, %503 : vector<16x16xf32>
    %506 = arith.addf %500, %505 : vector<16x16xf32>
    %c82 = arith.constant 82 : index
    %507 = memref.load %arg2[%c82] : memref<98xf32, #tpu.memory_space<smem>>
    %c1_263 = arith.constant 1 : index
    %c4_264 = arith.constant 4 : index
    %c5_265 = arith.constant 5 : index
    %508 = vector.load %arg4[%c1_263, %c4_264, %c5_265] : memref<2x22x22xf32, #tpu.memory_space<vmem>>, vector<1x16x16xf32>
    %509 = vector.shape_cast %508 : vector<1x16x16xf32> to vector<16x16xf32>
    %510 = vector.broadcast %507 : f32 to vector<16x16xf32>
    %511 = arith.mulf %510, %509 : vector<16x16xf32>
    %512 = arith.addf %506, %511 : vector<16x16xf32>
    %c83 = arith.constant 83 : index
    %513 = memref.load %arg2[%c83] : memref<98xf32, #tpu.memory_space<smem>>
    %c1_266 = arith.constant 1 : index
    %c4_267 = arith.constant 4 : index
    %c6_268 = arith.constant 6 : index
    %514 = vector.load %arg4[%c1_266, %c4_267, %c6_268] : memref<2x22x22xf32, #tpu.memory_space<vmem>>, vector<1x16x16xf32>
    %515 = vector.shape_cast %514 : vector<1x16x16xf32> to vector<16x16xf32>
    %516 = vector.broadcast %513 : f32 to vector<16x16xf32>
    %517 = arith.mulf %516, %515 : vector<16x16xf32>
    %518 = arith.addf %512, %517 : vector<16x16xf32>
    %c84 = arith.constant 84 : index
    %519 = memref.load %arg2[%c84] : memref<98xf32, #tpu.memory_space<smem>>
    %c1_269 = arith.constant 1 : index
    %c5_270 = arith.constant 5 : index
    %c0_271 = arith.constant 0 : index
    %520 = vector.load %arg4[%c1_269, %c5_270, %c0_271] : memref<2x22x22xf32, #tpu.memory_space<vmem>>, vector<1x16x16xf32>
    %521 = vector.shape_cast %520 : vector<1x16x16xf32> to vector<16x16xf32>
    %522 = vector.broadcast %519 : f32 to vector<16x16xf32>
    %523 = arith.mulf %522, %521 : vector<16x16xf32>
    %524 = arith.addf %518, %523 : vector<16x16xf32>
    %c85 = arith.constant 85 : index
    %525 = memref.load %arg2[%c85] : memref<98xf32, #tpu.memory_space<smem>>
    %c1_272 = arith.constant 1 : index
    %c5_273 = arith.constant 5 : index
    %c1_274 = arith.constant 1 : index
    %526 = vector.load %arg4[%c1_272, %c5_273, %c1_274] : memref<2x22x22xf32, #tpu.memory_space<vmem>>, vector<1x16x16xf32>
    %527 = vector.shape_cast %526 : vector<1x16x16xf32> to vector<16x16xf32>
    %528 = vector.broadcast %525 : f32 to vector<16x16xf32>
    %529 = arith.mulf %528, %527 : vector<16x16xf32>
    %530 = arith.addf %524, %529 : vector<16x16xf32>
    %c86 = arith.constant 86 : index
    %531 = memref.load %arg2[%c86] : memref<98xf32, #tpu.memory_space<smem>>
    %c1_275 = arith.constant 1 : index
    %c5_276 = arith.constant 5 : index
    %c2_277 = arith.constant 2 : index
    %532 = vector.load %arg4[%c1_275, %c5_276, %c2_277] : memref<2x22x22xf32, #tpu.memory_space<vmem>>, vector<1x16x16xf32>
    %533 = vector.shape_cast %532 : vector<1x16x16xf32> to vector<16x16xf32>
    %534 = vector.broadcast %531 : f32 to vector<16x16xf32>
    %535 = arith.mulf %534, %533 : vector<16x16xf32>
    %536 = arith.addf %530, %535 : vector<16x16xf32>
    %c87 = arith.constant 87 : index
    %537 = memref.load %arg2[%c87] : memref<98xf32, #tpu.memory_space<smem>>
    %c1_278 = arith.constant 1 : index
    %c5_279 = arith.constant 5 : index
    %c3_280 = arith.constant 3 : index
    %538 = vector.load %arg4[%c1_278, %c5_279, %c3_280] : memref<2x22x22xf32, #tpu.memory_space<vmem>>, vector<1x16x16xf32>
    %539 = vector.shape_cast %538 : vector<1x16x16xf32> to vector<16x16xf32>
    %540 = vector.broadcast %537 : f32 to vector<16x16xf32>
    %541 = arith.mulf %540, %539 : vector<16x16xf32>
    %542 = arith.addf %536, %541 : vector<16x16xf32>
    %c88 = arith.constant 88 : index
    %543 = memref.load %arg2[%c88] : memref<98xf32, #tpu.memory_space<smem>>
    %c1_281 = arith.constant 1 : index
    %c5_282 = arith.constant 5 : index
    %c4_283 = arith.constant 4 : index
    %544 = vector.load %arg4[%c1_281, %c5_282, %c4_283] : memref<2x22x22xf32, #tpu.memory_space<vmem>>, vector<1x16x16xf32>
    %545 = vector.shape_cast %544 : vector<1x16x16xf32> to vector<16x16xf32>
    %546 = vector.broadcast %543 : f32 to vector<16x16xf32>
    %547 = arith.mulf %546, %545 : vector<16x16xf32>
    %548 = arith.addf %542, %547 : vector<16x16xf32>
    %c89 = arith.constant 89 : index
    %549 = memref.load %arg2[%c89] : memref<98xf32, #tpu.memory_space<smem>>
    %c1_284 = arith.constant 1 : index
    %c5_285 = arith.constant 5 : index
    %c5_286 = arith.constant 5 : index
    %550 = vector.load %arg4[%c1_284, %c5_285, %c5_286] : memref<2x22x22xf32, #tpu.memory_space<vmem>>, vector<1x16x16xf32>
    %551 = vector.shape_cast %550 : vector<1x16x16xf32> to vector<16x16xf32>
    %552 = vector.broadcast %549 : f32 to vector<16x16xf32>
    %553 = arith.mulf %552, %551 : vector<16x16xf32>
    %554 = arith.addf %548, %553 : vector<16x16xf32>
    %c90 = arith.constant 90 : index
    %555 = memref.load %arg2[%c90] : memref<98xf32, #tpu.memory_space<smem>>
    %c1_287 = arith.constant 1 : index
    %c5_288 = arith.constant 5 : index
    %c6_289 = arith.constant 6 : index
    %556 = vector.load %arg4[%c1_287, %c5_288, %c6_289] : memref<2x22x22xf32, #tpu.memory_space<vmem>>, vector<1x16x16xf32>
    %557 = vector.shape_cast %556 : vector<1x16x16xf32> to vector<16x16xf32>
    %558 = vector.broadcast %555 : f32 to vector<16x16xf32>
    %559 = arith.mulf %558, %557 : vector<16x16xf32>
    %560 = arith.addf %554, %559 : vector<16x16xf32>
    %c91 = arith.constant 91 : index
    %561 = memref.load %arg2[%c91] : memref<98xf32, #tpu.memory_space<smem>>
    %c1_290 = arith.constant 1 : index
    %c6_291 = arith.constant 6 : index
    %c0_292 = arith.constant 0 : index
    %562 = vector.load %arg4[%c1_290, %c6_291, %c0_292] : memref<2x22x22xf32, #tpu.memory_space<vmem>>, vector<1x16x16xf32>
    %563 = vector.shape_cast %562 : vector<1x16x16xf32> to vector<16x16xf32>
    %564 = vector.broadcast %561 : f32 to vector<16x16xf32>
    %565 = arith.mulf %564, %563 : vector<16x16xf32>
    %566 = arith.addf %560, %565 : vector<16x16xf32>
    %c92 = arith.constant 92 : index
    %567 = memref.load %arg2[%c92] : memref<98xf32, #tpu.memory_space<smem>>
    %c1_293 = arith.constant 1 : index
    %c6_294 = arith.constant 6 : index
    %c1_295 = arith.constant 1 : index
    %568 = vector.load %arg4[%c1_293, %c6_294, %c1_295] : memref<2x22x22xf32, #tpu.memory_space<vmem>>, vector<1x16x16xf32>
    %569 = vector.shape_cast %568 : vector<1x16x16xf32> to vector<16x16xf32>
    %570 = vector.broadcast %567 : f32 to vector<16x16xf32>
    %571 = arith.mulf %570, %569 : vector<16x16xf32>
    %572 = arith.addf %566, %571 : vector<16x16xf32>
    %c93 = arith.constant 93 : index
    %573 = memref.load %arg2[%c93] : memref<98xf32, #tpu.memory_space<smem>>
    %c1_296 = arith.constant 1 : index
    %c6_297 = arith.constant 6 : index
    %c2_298 = arith.constant 2 : index
    %574 = vector.load %arg4[%c1_296, %c6_297, %c2_298] : memref<2x22x22xf32, #tpu.memory_space<vmem>>, vector<1x16x16xf32>
    %575 = vector.shape_cast %574 : vector<1x16x16xf32> to vector<16x16xf32>
    %576 = vector.broadcast %573 : f32 to vector<16x16xf32>
    %577 = arith.mulf %576, %575 : vector<16x16xf32>
    %578 = arith.addf %572, %577 : vector<16x16xf32>
    %c94 = arith.constant 94 : index
    %579 = memref.load %arg2[%c94] : memref<98xf32, #tpu.memory_space<smem>>
    %c1_299 = arith.constant 1 : index
    %c6_300 = arith.constant 6 : index
    %c3_301 = arith.constant 3 : index
    %580 = vector.load %arg4[%c1_299, %c6_300, %c3_301] : memref<2x22x22xf32, #tpu.memory_space<vmem>>, vector<1x16x16xf32>
    %581 = vector.shape_cast %580 : vector<1x16x16xf32> to vector<16x16xf32>
    %582 = vector.broadcast %579 : f32 to vector<16x16xf32>
    %583 = arith.mulf %582, %581 : vector<16x16xf32>
    %584 = arith.addf %578, %583 : vector<16x16xf32>
    %c95 = arith.constant 95 : index
    %585 = memref.load %arg2[%c95] : memref<98xf32, #tpu.memory_space<smem>>
    %c1_302 = arith.constant 1 : index
    %c6_303 = arith.constant 6 : index
    %c4_304 = arith.constant 4 : index
    %586 = vector.load %arg4[%c1_302, %c6_303, %c4_304] : memref<2x22x22xf32, #tpu.memory_space<vmem>>, vector<1x16x16xf32>
    %587 = vector.shape_cast %586 : vector<1x16x16xf32> to vector<16x16xf32>
    %588 = vector.broadcast %585 : f32 to vector<16x16xf32>
    %589 = arith.mulf %588, %587 : vector<16x16xf32>
    %590 = arith.addf %584, %589 : vector<16x16xf32>
    %c96 = arith.constant 96 : index
    %591 = memref.load %arg2[%c96] : memref<98xf32, #tpu.memory_space<smem>>
    %c1_305 = arith.constant 1 : index
    %c6_306 = arith.constant 6 : index
    %c5_307 = arith.constant 5 : index
    %592 = vector.load %arg4[%c1_305, %c6_306, %c5_307] : memref<2x22x22xf32, #tpu.memory_space<vmem>>, vector<1x16x16xf32>
    %593 = vector.shape_cast %592 : vector<1x16x16xf32> to vector<16x16xf32>
    %594 = vector.broadcast %591 : f32 to vector<16x16xf32>
    %595 = arith.mulf %594, %593 : vector<16x16xf32>
    %596 = arith.addf %590, %595 : vector<16x16xf32>
    %c97 = arith.constant 97 : index
    %597 = memref.load %arg2[%c97] : memref<98xf32, #tpu.memory_space<smem>>
    %c1_308 = arith.constant 1 : index
    %c6_309 = arith.constant 6 : index
    %c6_310 = arith.constant 6 : index
    %598 = vector.load %arg4[%c1_308, %c6_309, %c6_310] : memref<2x22x22xf32, #tpu.memory_space<vmem>>, vector<1x16x16xf32>
    %599 = vector.shape_cast %598 : vector<1x16x16xf32> to vector<16x16xf32>
    %600 = vector.broadcast %597 : f32 to vector<16x16xf32>
    %601 = arith.mulf %600, %599 : vector<16x16xf32>
    %602 = arith.addf %596, %601 : vector<16x16xf32>
    %cst_311 = arith.constant 0.000000e+00 : f32
    %603 = vector.broadcast %cst_311 : f32 to vector<16x16xf32>
    %604 = arith.subf %603, %602 : vector<16x16xf32>
    %605 = math.exp %604 : vector<16x16xf32>
    %cst_312 = arith.constant 1.000000e+00 : f32
    %606 = vector.broadcast %cst_312 : f32 to vector<16x16xf32>
    %607 = arith.addf %606, %605 : vector<16x16xf32>
    %cst_313 = arith.constant 1.000000e+00 : f32
    %608 = vector.broadcast %cst_313 : f32 to vector<16x16xf32>
    %609 = arith.divf %608, %607 : vector<16x16xf32>
    %c0_314 = arith.constant 0 : index
    %c0_315 = arith.constant 0 : index
    %c0_316 = arith.constant 0 : index
    %c0_317 = arith.constant 0 : index
    %610 = vector.load %arg3[%c0_314, %c0_315, %c0_316, %c0_317] : memref<1x1x16x16xf32, #tpu.memory_space<vmem>>, vector<1x1x16x16xf32>
    %611 = vector.shape_cast %610 : vector<1x1x16x16xf32> to vector<16x16xf32>
    %612 = vector.shape_cast %609 : vector<16x16xf32> to vector<1x1x16x16xf32>
    tpu.vector_store %arg3[%c0_314, %c0_315, %c0_316, %c0_317], %612 {strides = array<i32>} : memref<1x1x16x16xf32, #tpu.memory_space<vmem>>, vector<1x1x16x16xf32>,
    return
  }
  func.func @transform_0(%arg0: i32) -> (i32, i32, i32, i32) {
    %c0_i32 = arith.constant 0 : i32
    %c0_i32_0 = arith.constant 0 : i32
    %c0_i32_1 = arith.constant 0 : i32
    %c0_i32_2 = arith.constant 0 : i32
    return %arg0, %c0_i32, %c0_i32_0, %c0_i32_1 : i32, i32, i32, i32
  }
  func.func @transform_1(%arg0: i32) -> i32 {
    %c0_i32 = arith.constant 0 : i32
    %c0_i32_0 = arith.constant 0 : i32
    return %c0_i32 : i32
  }
  func.func @transform_2(%arg0: i32) -> (i32, i32, i32, i32) {
    %c0_i32 = arith.constant 0 : i32
    %c0_i32_0 = arith.constant 0 : i32
    %c0_i32_1 = arith.constant 0 : i32
    %c0_i32_2 = arith.constant 0 : i32
    return %arg0, %c0_i32, %c0_i32_0, %c0_i32_1 : i32, i32, i32, i32
  }
}

</mosaic_0001>

<llo_original>
// kernel: tpu_custom_call.1
$region0: #{tpu_custom_call.1}
  #allocation0 [shape = 'u32[]', space=smem, size = 0x4, offset = 0x4, fixed_abs, tag = 'smem constant byte address 0x4 - core index']
  #allocation1 [shape = 'u32[144,128]{1,0:T(1,128)}', space=vmem, size = 0x12000, scoped, tag = 'internal scratch']
  #allocation2 [shape = 'f32[2,22,22]{2,1,0:T(8,128)}', space=vmem, size = 0x6000, scoped, tag = 'scratch operand']
  %s0 = inlined_call_operand.hbm [shape: f32[2,4,16,16], index: 0, kind: input, shape index: {}]
  %s1 = inlined_call_operand.vmem [shape: f32[98], index: 1, kind: input, shape index: {}]
  %s2 = inlined_call_operand.hbm [shape: f32[2,1,16,16], index: 2, kind: output, shape index: {}]
  %s3 = sld [smem:[#allocation0]]
  $region49: #{tpu_custom_call.1} parent=0
    _
  %s5 = ssub.s32 1, %s3
  %s6 = scalar_select 0, %s5, %s3
  $region1: #{tpu_custom_call.1} parent=0
    #allocation3 [shape = 'u8[65536]{0}', space=vmem, size = 0x10000, scoped, tag = 'input window, operand 0']
    #allocation4 [shape = 's32[2]{0}', space=sflag, size = 0x8, scoped, tag = 'scoped memory for tpu_custom_call.1']
    #allocation5 [shape = 's32[2]{0}', space=sflag, size = 0x8, scoped, tag = 'scoped memory for tpu_custom_call.1']
    #allocation6 [shape = 's32[2]{0}', space=sflag, size = 0x8, scoped, tag = 'scoped memory for tpu_custom_call.1']
    #allocation7 [shape = 'u8[512]{0}', space=smem, size = 0x200, scoped, tag = 'input window, operand 1, single buffered']
    #allocation8 [shape = 'u8[16384]{0}', space=vmem, size = 0x4000, scoped, tag = 'output window, operand 0']
    %7 = vsyncpa [#allocation4], 0
    %s8 = scalar_lea.sflag [#allocation4], 1
    %9 = vsyncpa %s8, 0
    %10 = vsyncpa [#allocation6], 0
    %11 = vsyncpa [#allocation5], 0
    %s12 = scalar_lea.sflag [#allocation5], 1
    %13 = vsyncpa %s12, 0
    loop: start=0, step=1, limit=4
    $region2: #{tpu_custom_call.1} parent=1 // loop_pre_header
      _
    $region3: #{tpu_custom_call.1} parent=1 // loop_header
      %s15 = sphi 0, %s19
      %p16 = scmp.ge.s32.totalorder %s15, 4
      %s25 = sphi 0, %s27
      %s28 = sphi 0, %s25
      %s29 = sphi 0, %s28
      %s45 = sphi 0, %s29
      %s49 = sphi 0, %s49
      %s51 = sphi 0, %s49
      %s52 = sphi 0, %s51
      %s66 = sphi 0, %s52
      %s72 = sphi 0, %s74
      %s75 = sphi 0, %s72
      %s76 = sphi 0, %s75
      %s92 = sphi 0, %s76
    $region4: #{tpu_custom_call.1} parent=1 // loop_header_branch
      %18 = sbr.rel (%p16) target = $region8
    $region5: #{tpu_custom_call.1} parent=1 // loop_body
      %s20 = ssub.s32 %s15, 1
      %s21 = ssub.s32 %s15, 2
      %s22 = sadd.s32 %s15, 1
      %s23 = ssub.s32 %s15, %s22
      %p24 = scmp.eq.s32.totalorder %s23, 0
      %s26 = sadd.s32 %s25, 1
      %s27 = scalar_select %p24, %s25, %s26
      %p30 = pneg %p24
      %p31 = scmp.eq.s32.totalorder %s15, 1
      %p32 = por %p30, %p31
      %p33 = scmp.ne.s32.totalorder %s25, %s28
      %p34 = scmp.eq.s32.totalorder %s15, 0
      %p35 = por %p33, %p34
      %p36 = scmp.ne.s32.totalorder %s25, %s28
      %p37 = scmp.eq.s32.totalorder %s20, 1
      %p38 = por %p36, %p37
      %p39 = scmp.ne.s32.totalorder %s28, %s29
      %p40 = scmp.eq.s32.totalorder %s20, 0
      %p41 = por %p39, %p40
      %p42 = scmp.ne.s32.totalorder %s28, %s29
      %p43 = scmp.eq.s32.totalorder %s21, 1
      %p44 = por %p42, %p43
      %p46 = scmp.ne.s32.totalorder %s29, %s45
      %p47 = scmp.eq.s32.totalorder %s21, 0
      %p48 = por %p46, %p47
      %s50 = sadd.s32 %s49, 1
      %p53 = scmp.eq.s32.totalorder %s15, 1
      %p54 = scmp.ne.s32.totalorder %s49, %s51
      %p55 = scmp.eq.s32.totalorder %s15, 0
      %p56 = por %p54, %p55
      %p57 = scmp.ne.s32.totalorder %s49, %s51
      %p58 = scmp.eq.s32.totalorder %s20, 1
      %p59 = por %p57, %p58
      %p60 = scmp.ne.s32.totalorder %s51, %s52
      %p61 = scmp.eq.s32.totalorder %s20, 0
      %p62 = por %p60, %p61
      %p63 = scmp.ne.s32.totalorder %s51, %s52
      %p64 = scmp.eq.s32.totalorder %s21, 1
      %p65 = por %p63, %p64
      %p67 = scmp.ne.s32.totalorder %s52, %s66
      %p68 = scmp.eq.s32.totalorder %s21, 0
      %p69 = por %p67, %p68
      %s70 = ssub.s32 %s15, %s22
      %p71 = scmp.eq.s32.totalorder %s70, 0
      %s73 = sadd.s32 %s72, 1
      %s74 = scalar_select %p71, %s72, %s73
      %p77 = pneg %p71
      %p78 = scmp.eq.s32.totalorder %s15, 1
      %p79 = por %p77, %p78
      %p80 = scmp.ne.s32.totalorder %s72, %s75
      %p81 = scmp.eq.s32.totalorder %s15, 0
      %p82 = por %p80, %p81
      %p83 = scmp.ne.s32.totalorder %s72, %s75
      %p84 = scmp.eq.s32.totalorder %s20, 1
      %p85 = por %p83, %p84
      %p86 = scmp.ne.s32.totalorder %s75, %s76
      %p87 = scmp.eq.s32.totalorder %s20, 0
      %p88 = por %p86, %p87
      %p89 = scmp.ne.s32.totalorder %s75, %s76
      %p90 = scmp.eq.s32.totalorder %s21, 1
      %p91 = por %p89, %p90
      %p93 = scmp.ne.s32.totalorder %s76, %s92
      %p94 = scmp.eq.s32.totalorder %s21, 0
      %p95 = por %p93, %p94
      %p96 = scmp.le.s32.totalorder 1, %s15
      %p97 = scmp.lt.s32.totalorder %s15, 3
      %p98 = pnand %p96, %p97
      %p99 = pneg %p98
      // Predicated region
      $region9: #{tpu_custom_call.1} parent=5 // pred_check
        _
      $region10: #{tpu_custom_call.1} parent=5 // pred_check_branch
        %101 = sbr.rel (%p98) target = $region12
      $region11: #{tpu_custom_call.1} parent=5 // pred_region
        %s102 = ssub.s32 %s15, 1
        // Predicated region
        $region13: #{tpu_custom_call.1} parent=11 // pred_check
          %p103 = pneg %p62
        $region14: #{tpu_custom_call.1} parent=11 // pred_check_branch
          %105 = sbr.rel (%p103) target = $region16
        $region15: #{tpu_custom_call.1} parent=11 // pred_region
          %s107 = ssub.s32 16, 16
          %108 = vsyncadd [#allocation6], %s107
          %s110 = sshll.u32 %s1, 4
          %s111 = int_to_ptr.vmem [resolvable:$true] %s110
          %113 = dma.vmem_to_smem %s111, 16, [#allocation7], [#allocation6]
        $region16: #{tpu_custom_call.1} parent=11 // pred_fallthru
          _
      $region12: #{tpu_custom_call.1} parent=5 // pred_fallthru
        _
      %p114 = scmp.lt.s32.totalorder %s15, 2
      // Predicated region
      $region17: #{tpu_custom_call.1} parent=5 // pred_check
        %p115 = pneg %p114
      $region18: #{tpu_custom_call.1} parent=5 // pred_check_branch
        %117 = sbr.rel (%p115) target = $region20
      $region19: #{tpu_custom_call.1} parent=5 // pred_region
        // Predicated region
        $region21: #{tpu_custom_call.1} parent=19 // pred_check
          %p118 = pneg %p35
        $region22: #{tpu_custom_call.1} parent=19 // pred_check_branch
          %120 = sbr.rel (%p118) target = $region24
        $region23: #{tpu_custom_call.1} parent=19 // pred_region
          %s121 = sand.u32 %s25, 1
          %s122 = scalar_lea.sflag [#allocation4], %s121
          %s123 = sand.u32 %s25, 1
          %s124 = smul.addr %s123, 64
          %s125 = scalar_lea.vmem [#allocation3], %s124
          %s127 = ssub.s32 1024, 1024
          %128 = vsyncadd %s122, %s127
          %s129 = smul.addr %s15, 8
          %s130 = smul.addr %s129, 128
          %s131 = scalar_lea.hbm %s0, %s130
          %s132 = sshll.u32 %s125, 4
          %s133 = int_to_ptr.vmem [resolvable:$true] %s132
          %138 = dma.hbm_to_vmem [thread:$0]  %s131, 1024, %s133, %s122, 128, 128, 8
        $region24: #{tpu_custom_call.1} parent=19 // pred_fallthru
          _
      $region20: #{tpu_custom_call.1} parent=5 // pred_fallthru
        _
      %p139 = scmp.le.s32.totalorder 1, %s15
      %p140 = scmp.lt.s32.totalorder %s15, 3
      %p141 = pnand %p139, %p140
      %p142 = pneg %p141
      // Predicated region
      $region25: #{tpu_custom_call.1} parent=5 // pred_check
        _
      $region26: #{tpu_custom_call.1} parent=5 // pred_check_branch
        %144 = sbr.rel (%p141) target = $region28
      $region27: #{tpu_custom_call.1} parent=5 // pred_region
        %s145 = ssub.s32 %s15, 1
        %s146 = sand.u32 %s28, 1
        %s147 = scalar_lea.sflag [#allocation4], %s146
        %s148 = sand.u32 %s28, 1
        %s149 = smul.addr %s148, 64
        %s150 = scalar_lea.vmem [#allocation3], %s149
        // Predicated region
        $region29: #{tpu_custom_call.1} parent=27 // pred_check
          %p151 = pneg %p41
        $region30: #{tpu_custom_call.1} parent=27 // pred_check_branch
          %153 = sbr.rel (%p151) target = $region32
        $region31: #{tpu_custom_call.1} parent=27 // pred_region
          %154 = dma.done %s147, 1024
        $region32: #{tpu_custom_call.1} parent=27 // pred_fallthru
          _
        // Predicated region
        $region33: #{tpu_custom_call.1} parent=27 // pred_check
          %p155 = pneg %p62
        $region34: #{tpu_custom_call.1} parent=27 // pred_check_branch
          %157 = sbr.rel (%p155) target = $region36
        $region35: #{tpu_custom_call.1} parent=27 // pred_region
          %158 = dma.done [#allocation6], 16
        $region36: #{tpu_custom_call.1} parent=27 // pred_fallthru
          _
        %159 = sfence
        %s160 = sand.u32 %s28, 1
        %s161 = scalar_lea.sflag [#allocation4], %s160
        %s162 = sand.u32 %s28, 1
        %s163 = smul.addr %s162, 64
        %s164 = scalar_lea.vmem [#allocation3], %s163
        %p165 = pneg %p41
        %p166 = pneg %p38
        %p167 = pneg %p62
        %p168 = pneg %p59
        %p169 = pneg %p88
        %p170 = pneg %p85
        %s171 = sand.u32 %s75, 1
        %s172 = scalar_lea.sflag [#allocation5], %s171
        %s173 = sand.u32 %s75, 1
        %s174 = smul.addr %s173, 16
        %s175 = scalar_lea.vmem [#allocation8], %s174
        %v176 = vld [vmem:[%s150] sm:$0xff]
        %v177 = vld [vmem:[%s150 + $0x8] sm:$0xff]
        %v178 = vld [vmem:[%s150 + $0x10] sm:$0xff]
        %v179 = vld [vmem:[%s150 + $0x18] sm:$0xff]
        %v180 = vld [vmem:[%s150 + $0x20] sm:$0xff]
        %v181 = vld [vmem:[%s150 + $0x28] sm:$0xff]
        %v182 = vld [vmem:[%s150 + $0x30] sm:$0xff]
        %v183 = vld [vmem:[%s150 + $0x38] sm:$0xff]
        %vm184 = vcmask 130048
        %v185 = vsel %vm184, %v176, 0.0
        %v186 = vsel %vm184, %v178, 0.0
        %v187 = vadd.f32 %v185, %v186
        %v188 = vsel %vm184, %v180, 0.0
        %v189 = vadd.f32 %v187, %v188
        %v190 = vsel %vm184, %v182, 0.0
        %v191 = vadd.f32 %v189, %v190
        %v192 = vsel %vm184, %v177, 0.0
        %v193 = vsel %vm184, %v179, 0.0
        %v194 = vadd.f32 %v192, %v193
        %v195 = vsel %vm184, %v181, 0.0
        %v196 = vadd.f32 %v194, %v195
        %v197 = vsel %vm184, %v183, 0.0
        %v198 = vadd.f32 %v196, %v197
        %v199 = vrcp.pop 4.0
        %v200 = vmul.f32 %v191, %v199
        %v201 = vmul.f32 %v198, %v199
        %v202 = vsel %vm184, %v176, -inf
        %v203 = vsel %vm184, %v178, -inf
        %v204 = vsel %vm184, %v180, -inf
        %v205 = vmax.f32 %v202, %v204
        %v206 = vsel %vm184, %v182, -inf
        %v207 = vmax.f32 %v203, %v206
        %v208 = vmax.f32 %v205, %v207
        %v209 = vsel %vm184, %v177, -inf
        %v210 = vsel %vm184, %v179, -inf
        %v211 = vsel %vm184, %v181, -inf
        %v212 = vmax.f32 %v209, %v211
        %v213 = vsel %vm184, %v183, -inf
        %v214 = vmax.f32 %v210, %v213
        %v215 = vmax.f32 %v212, %v214
        %vm216 = vcmask 179200
        %217 = vst.msk [vmem:[#allocation2] sm:$0xff] %vm216, 0.0
        %218 = vst.msk [vmem:[#allocation2 + $0x8] sm:$0xff] %vm216, 0.0
        %vm219 = vcmask 177152
        %220 = vst.msk [vmem:[#allocation2 + $0x10] sm:$0x3f] %vm219, 0.0
        %221 = vst.msk [vmem:[#allocation2 + $0x18] sm:$0xff] %vm216, 0.0
        %222 = vst.msk [vmem:[#allocation2 + $0x20] sm:$0xff] %vm216, 0.0
        %223 = vst.msk [vmem:[#allocation2 + $0x28] sm:$0x3f] %vm219, 0.0
        %226 = vrot.lane.b32.xlu0 %v200, 3
        %v227 = vpop.permute.xlu0 %226
        %228 = vrot.lane.b32.xlu0 %v201, 3
        %v229 = vpop.permute.xlu0 %228
        %vm232 = vcmask 154648
        %233 = vst.msk [vmem:[#allocation2 + $0x3] sm:$0xff] %vm232, %v227
        %234 = vst.msk [vmem:[#allocation2 + $0xb] sm:$0xff] %vm232, %v229
        %237 = vrot.lane.b32.xlu0 %v208, 3
        %v238 = vpop.permute.xlu0 %237
        %239 = vrot.lane.b32.xlu0 %v215, 3
        %v240 = vpop.permute.xlu0 %239
        %s243 = scalar_lea.vmem [#allocation2], 24
        %244 = vst.msk [vmem:[%s243 + $0x3] sm:$0xff] %vm232, %v238
        %245 = vst.msk [vmem:[%s243 + $0xb] sm:$0xff] %vm232, %v240
        %s246 = sld [smem:[#allocation7]]
        %v247 = vld [vmem:[#allocation2] sm:$0xff]
        %v248 = vld [vmem:[#allocation2 + $0x8] sm:$0xff]
        %v249 = vstv %s246
        %v250 = vmul.f32 %v249, %v247
        %v251 = vmul.f32 %v249, %v248
        %v252 = vadd.f32 %v250, 0.0
        %v253 = vadd.f32 %v251, 0.0
        %s254 = sld [smem:[#allocation7 + $0x1]]
        %v255 = vstv %s254
        %v256 = vmul.f32 %v255, %v247
        %v257 = vmul.f32 %v255, %v248
        %260 = vrot.lane.b32.xlu0 %v256, 127
        %v261 = vpop.permute.xlu0 %260
        %262 = vrot.lane.b32.xlu0 %v257, 127
        %v263 = vpop.permute.xlu0 %262
        %v266 = vadd.f32 %v252, %v261
        %v267 = vadd.f32 %v253, %v263
        %s268 = sld [smem:[#allocation7 + $0x2]]
        %v269 = vstv %s268
        %v270 = vmul.f32 %v269, %v247
        %v271 = vmul.f32 %v269, %v248
        %274 = vrot.lane.b32.xlu0 %v270, 126
        %v275 = vpop.permute.xlu0 %274
        %276 = vrot.lane.b32.xlu0 %v271, 126
        %v277 = vpop.permute.xlu0 %276
        %v280 = vadd.f32 %v266, %v275
        %v281 = vadd.f32 %v267, %v277
        %s282 = sld [smem:[#allocation7 + $0x3]]
        %v283 = vstv %s282
        %v284 = vmul.f32 %v283, %v247
        %v285 = vmul.f32 %v283, %v248
        %288 = vrot.lane.b32.xlu0 %v284, 125
        %v289 = vpop.permute.xlu0 %288
        %290 = vrot.lane.b32.xlu0 %v285, 125
        %v291 = vpop.permute.xlu0 %290
        %v294 = vadd.f32 %v280, %v289
        %v295 = vadd.f32 %v281, %v291
        %s296 = sld [smem:[#allocation7 + $0x4]]
        %v297 = vstv %s296
        %v298 = vmul.f32 %v297, %v247
        %v299 = vmul.f32 %v297, %v248
        %302 = vrot.lane.b32.xlu0 %v298, 124
        %v303 = vpop.permute.xlu0 %302
        %304 = vrot.lane.b32.xlu0 %v299, 124
        %v305 = vpop.permute.xlu0 %304
        %v308 = vadd.f32 %v294, %v303
        %v309 = vadd.f32 %v295, %v305
        %s310 = sld [smem:[#allocation7 + $0x5]]
        %v311 = vstv %s310
        %v312 = vmul.f32 %v311, %v247
        %v313 = vmul.f32 %v311, %v248
        %316 = vrot.lane.b32.xlu0 %v312, 123
        %v317 = vpop.permute.xlu0 %316
        %318 = vrot.lane.b32.xlu0 %v313, 123
        %v319 = vpop.permute.xlu0 %318
        %v322 = vadd.f32 %v308, %v317
        %v323 = vadd.f32 %v309, %v319
        %s324 = sld [smem:[#allocation7 + $0x6]]
        %v325 = vstv %s324
        %v326 = vmul.f32 %v325, %v247
        %v327 = vmul.f32 %v325, %v248
        %330 = vrot.lane.b32.xlu0 %v326, 122
        %v331 = vpop.permute.xlu0 %330
        %332 = vrot.lane.b32.xlu0 %v327, 122
        %v333 = vpop.permute.xlu0 %332
        %v336 = vadd.f32 %v322, %v331
        %v337 = vadd.f32 %v323, %v333
        %s338 = sld [smem:[#allocation7 + $0x7]]
        %v339 = vld [vmem:[#allocation2 + $0x1] sm:$0xff]
        %v340 = vld [vmem:[#allocation2 + $0x9] sm:$0xff]
        %v341 = vstv %s338
        %v342 = vmul.f32 %v341, %v339
        %v343 = vmul.f32 %v341, %v340
        %v344 = vadd.f32 %v336, %v342
        %v345 = vadd.f32 %v337, %v343
        %s346 = sld [smem:[#allocation7 + $0x8]]
        %v347 = vstv %s346
        %v348 = vmul.f32 %v347, %v339
        %v349 = vmul.f32 %v347, %v340
        %352 = vrot.lane.b32.xlu0 %v348, 127
        %v353 = vpop.permute.xlu0 %352
        %354 = vrot.lane.b32.xlu0 %v349, 127
        %v355 = vpop.permute.xlu0 %354
        %v358 = vadd.f32 %v344, %v353
        %v359 = vadd.f32 %v345, %v355
        %s360 = sld [smem:[#allocation7 + $0x9]]
        %v361 = vstv %s360
        %v362 = vmul.f32 %v361, %v339
        %v363 = vmul.f32 %v361, %v340
        %366 = vrot.lane.b32.xlu0 %v362, 126
        %v367 = vpop.permute.xlu0 %366
        %368 = vrot.lane.b32.xlu0 %v363, 126
        %v369 = vpop.permute.xlu0 %368
        %v372 = vadd.f32 %v358, %v367
        %v373 = vadd.f32 %v359, %v369
        %s374 = sld [smem:[#allocation7 + $0xa]]
        %v375 = vstv %s374
        %v376 = vmul.f32 %v375, %v339
        %v377 = vmul.f32 %v375, %v340
        %380 = vrot.lane.b32.xlu0 %v376, 125
        %v381 = vpop.permute.xlu0 %380
        %382 = vrot.lane.b32.xlu0 %v377, 125
        %v383 = vpop.permute.xlu0 %382
        %v386 = vadd.f32 %v372, %v381
        %v387 = vadd.f32 %v373, %v383
        %s388 = sld [smem:[#allocation7 + $0xb]]
        %v389 = vstv %s388
        %v390 = vmul.f32 %v389, %v339
        %v391 = vmul.f32 %v389, %v340
        %394 = vrot.lane.b32.xlu0 %v390, 124
        %v395 = vpop.permute.xlu0 %394
        %396 = vrot.lane.b32.xlu0 %v391, 124
        %v397 = vpop.permute.xlu0 %396
        %v400 = vadd.f32 %v386, %v395
        %v401 = vadd.f32 %v387, %v397
        %s402 = sld [smem:[#allocation7 + $0xc]]
        %v403 = vstv %s402
        %v404 = vmul.f32 %v403, %v339
        %v405 = vmul.f32 %v403, %v340
        %408 = vrot.lane.b32.xlu0 %v404, 123
        %v409 = vpop.permute.xlu0 %408
        %410 = vrot.lane.b32.xlu0 %v405, 123
        %v411 = vpop.permute.xlu0 %410
        %v414 = vadd.f32 %v400, %v409
        %v415 = vadd.f32 %v401, %v411
        %s416 = sld [smem:[#allocation7 + $0xd]]
        %v417 = vstv %s416
        %v418 = vmul.f32 %v417, %v339
        %v419 = vmul.f32 %v417, %v340
        %422 = vrot.lane.b32.xlu0 %v418, 122
        %v423 = vpop.permute.xlu0 %422
        %424 = vrot.lane.b32.xlu0 %v419, 122
        %v425 = vpop.permute.xlu0 %424
        %v428 = vadd.f32 %v414, %v423
        %v429 = vadd.f32 %v415, %v425
        %s430 = sld [smem:[#allocation7 + $0xe]]
        %v431 = vld [vmem:[#allocation2 + $0x2] sm:$0xff]
        %v432 = vld [vmem:[#allocation2 + $0xa] sm:$0xff]
        %v433 = vstv %s430
        %v434 = vmul.f32 %v433, %v431
        %v435 = vmul.f32 %v433, %v432
        %v436 = vadd.f32 %v428, %v434
        %v437 = vadd.f32 %v429, %v435
        %s438 = sld [smem:[#allocation7 + $0xf]]
        %v439 = vstv %s438
        %v440 = vmul.f32 %v439, %v431
        %v441 = vmul.f32 %v439, %v432
        %444 = vrot.lane.b32.xlu0 %v440, 127
        %v445 = vpop.permute.xlu0 %444
        %446 = vrot.lane.b32.xlu0 %v441, 127
        %v447 = vpop.permute.xlu0 %446
        %v450 = vadd.f32 %v436, %v445
        %v451 = vadd.f32 %v437, %v447
        %s452 = sld [smem:[#allocation7 + $0x10]]
        %v453 = vstv %s452
        %v454 = vmul.f32 %v453, %v431
        %v455 = vmul.f32 %v453, %v432
        %458 = vrot.lane.b32.xlu0 %v454, 126
        %v459 = vpop.permute.xlu0 %458
        %460 = vrot.lane.b32.xlu0 %v455, 126
        %v461 = vpop.permute.xlu0 %460
        %v464 = vadd.f32 %v450, %v459
        %v465 = vadd.f32 %v451, %v461
        %s466 = sld [smem:[#allocation7 + $0x11]]
        %v467 = vstv %s466
        %v468 = vmul.f32 %v467, %v431
        %v469 = vmul.f32 %v467, %v432
        %472 = vrot.lane.b32.xlu0 %v468, 125
        %v473 = vpop.permute.xlu0 %472
        %474 = vrot.lane.b32.xlu0 %v469, 125
        %v475 = vpop.permute.xlu0 %474
        %v478 = vadd.f32 %v464, %v473
        %v479 = vadd.f32 %v465, %v475
        %s480 = sld [smem:[#allocation7 + $0x12]]
        %v481 = vstv %s480
        %v482 = vmul.f32 %v481, %v431
        %v483 = vmul.f32 %v481, %v432
        %486 = vrot.lane.b32.xlu0 %v482, 124
        %v487 = vpop.permute.xlu0 %486
        %488 = vrot.lane.b32.xlu0 %v483, 124
        %v489 = vpop.permute.xlu0 %488
        %v492 = vadd.f32 %v478, %v487
        %v493 = vadd.f32 %v479, %v489
        %s494 = sld [smem:[#allocation7 + $0x13]]
        %v495 = vstv %s494
        %v496 = vmul.f32 %v495, %v431
        %v497 = vmul.f32 %v495, %v432
        %500 = vrot.lane.b32.xlu0 %v496, 123
        %v501 = vpop.permute.xlu0 %500
        %502 = vrot.lane.b32.xlu0 %v497, 123
        %v503 = vpop.permute.xlu0 %502
        %v506 = vadd.f32 %v492, %v501
        %v507 = vadd.f32 %v493, %v503
        %s508 = sld [smem:[#allocation7 + $0x14]]
        %v509 = vstv %s508
        %v510 = vmul.f32 %v509, %v431
        %v511 = vmul.f32 %v509, %v432
        %514 = vrot.lane.b32.xlu0 %v510, 122
        %v515 = vpop.permute.xlu0 %514
        %516 = vrot.lane.b32.xlu0 %v511, 122
        %v517 = vpop.permute.xlu0 %516
        %v520 = vadd.f32 %v506, %v515
        %v521 = vadd.f32 %v507, %v517
        %s522 = sld [smem:[#allocation7 + $0x15]]
        %v523 = vld [vmem:[#allocation2 + $0x3] sm:$0xff]
        %v524 = vld [vmem:[#allocation2 + $0xb] sm:$0xff]
        %v525 = vstv %s522
        %v526 = vmul.f32 %v525, %v523
        %v527 = vmul.f32 %v525, %v524
        %v528 = vadd.f32 %v520, %v526
        %v529 = vadd.f32 %v521, %v527
        %s530 = sld [smem:[#allocation7 + $0x16]]
        %v531 = vstv %s530
        %v532 = vmul.f32 %v531, %v523
        %v533 = vmul.f32 %v531, %v524
        %536 = vrot.lane.b32.xlu0 %v532, 127
        %v537 = vpop.permute.xlu0 %536
        %538 = vrot.lane.b32.xlu0 %v533, 127
        %v539 = vpop.permute.xlu0 %538
        %v542 = vadd.f32 %v528, %v537
        %v543 = vadd.f32 %v529, %v539
        %s544 = sld [smem:[#allocation7 + $0x17]]
        %v545 = vstv %s544
        %v546 = vmul.f32 %v545, %v523
        %v547 = vmul.f32 %v545, %v524
        %550 = vrot.lane.b32.xlu0 %v546, 126
        %v551 = vpop.permute.xlu0 %550
        %552 = vrot.lane.b32.xlu0 %v547, 126
        %v553 = vpop.permute.xlu0 %552
        %v556 = vadd.f32 %v542, %v551
        %v557 = vadd.f32 %v543, %v553
        %s558 = sld [smem:[#allocation7 + $0x18]]
        %v559 = vstv %s558
        %v560 = vmul.f32 %v559, %v523
        %v561 = vmul.f32 %v559, %v524
        %564 = vrot.lane.b32.xlu0 %v560, 125
        %v565 = vpop.permute.xlu0 %564
        %566 = vrot.lane.b32.xlu0 %v561, 125
        %v567 = vpop.permute.xlu0 %566
        %v570 = vadd.f32 %v556, %v565
        %v571 = vadd.f32 %v557, %v567
        %s572 = sld [smem:[#allocation7 + $0x19]]
        %v573 = vstv %s572
        %v574 = vmul.f32 %v573, %v523
        %v575 = vmul.f32 %v573, %v524
        %578 = vrot.lane.b32.xlu0 %v574, 124
        %v579 = vpop.permute.xlu0 %578
        %580 = vrot.lane.b32.xlu0 %v575, 124
        %v581 = vpop.permute.xlu0 %580
        %v584 = vadd.f32 %v570, %v579
        %v585 = vadd.f32 %v571, %v581
        %s586 = sld [smem:[#allocation7 + $0x1a]]
        %v587 = vstv %s586
        %v588 = vmul.f32 %v587, %v523
        %v589 = vmul.f32 %v587, %v524
        %592 = vrot.lane.b32.xlu0 %v588, 123
        %v593 = vpop.permute.xlu0 %592
        %594 = vrot.lane.b32.xlu0 %v589, 123
        %v595 = vpop.permute.xlu0 %594
        %v598 = vadd.f32 %v584, %v593
        %v599 = vadd.f32 %v585, %v595
        %s600 = sld [smem:[#allocation7 + $0x1b]]
        %v601 = vstv %s600
        %v602 = vmul.f32 %v601, %v523
        %v603 = vmul.f32 %v601, %v524
        %606 = vrot.lane.b32.xlu0 %v602, 122
        %v607 = vpop.permute.xlu0 %606
        %608 = vrot.lane.b32.xlu0 %v603, 122
        %v609 = vpop.permute.xlu0 %608
        %v612 = vadd.f32 %v598, %v607
        %v613 = vadd.f32 %v599, %v609
        %s614 = sld [smem:[#allocation7 + $0x1c]]
        %v615 = vld [vmem:[#allocation2 + $0x4] sm:$0xff]
        %v616 = vld [vmem:[#allocation2 + $0xc] sm:$0xff]
        %v617 = vstv %s614
        %v618 = vmul.f32 %v617, %v615
        %v619 = vmul.f32 %v617, %v616
        %v620 = vadd.f32 %v612, %v618
        %v621 = vadd.f32 %v613, %v619
        %s622 = sld [smem:[#allocation7 + $0x1d]]
        %v623 = vstv %s622
        %v624 = vmul.f32 %v623, %v615
        %v625 = vmul.f32 %v623, %v616
        %628 = vrot.lane.b32.xlu0 %v624, 127
        %v629 = vpop.permute.xlu0 %628
        %630 = vrot.lane.b32.xlu0 %v625, 127
        %v631 = vpop.permute.xlu0 %630
        %v634 = vadd.f32 %v620, %v629
        %v635 = vadd.f32 %v621, %v631
        %s636 = sld [smem:[#allocation7 + $0x1e]]
        %v637 = vstv %s636
        %v638 = vmul.f32 %v637, %v615
        %v639 = vmul.f32 %v637, %v616
        %642 = vrot.lane.b32.xlu0 %v638, 126
        %v643 = vpop.permute.xlu0 %642
        %644 = vrot.lane.b32.xlu0 %v639, 126
        %v645 = vpop.permute.xlu0 %644
        %v648 = vadd.f32 %v634, %v643
        %v649 = vadd.f32 %v635, %v645
        %s650 = sld [smem:[#allocation7 + $0x1f]]
        %v651 = vstv %s650
        %v652 = vmul.f32 %v651, %v615
        %v653 = vmul.f32 %v651, %v616
        %656 = vrot.lane.b32.xlu0 %v652, 125
        %v657 = vpop.permute.xlu0 %656
        %658 = vrot.lane.b32.xlu0 %v653, 125
        %v659 = vpop.permute.xlu0 %658
        %v662 = vadd.f32 %v648, %v657
        %v663 = vadd.f32 %v649, %v659
        %s664 = sld [smem:[#allocation7 + $0x20]]
        %v665 = vstv %s664
        %v666 = vmul.f32 %v665, %v615
        %v667 = vmul.f32 %v665, %v616
        %670 = vrot.lane.b32.xlu0 %v666, 124
        %v671 = vpop.permute.xlu0 %670
        %672 = vrot.lane.b32.xlu0 %v667, 124
        %v673 = vpop.permute.xlu0 %672
        %v676 = vadd.f32 %v662, %v671
        %v677 = vadd.f32 %v663, %v673
        %s678 = sld [smem:[#allocation7 + $0x21]]
        %v679 = vstv %s678
        %v680 = vmul.f32 %v679, %v615
        %v681 = vmul.f32 %v679, %v616
        %684 = vrot.lane.b32.xlu0 %v680, 123
        %v685 = vpop.permute.xlu0 %684
        %686 = vrot.lane.b32.xlu0 %v681, 123
        %v687 = vpop.permute.xlu0 %686
        %v690 = vadd.f32 %v676, %v685
        %v691 = vadd.f32 %v677, %v687
        %s692 = sld [smem:[#allocation7 + $0x22]]
        %v693 = vstv %s692
        %v694 = vmul.f32 %v693, %v615
        %v695 = vmul.f32 %v693, %v616
        %698 = vrot.lane.b32.xlu0 %v694, 122
        %v699 = vpop.permute.xlu0 %698
        %700 = vrot.lane.b32.xlu0 %v695, 122
        %v701 = vpop.permute.xlu0 %700
        %v704 = vadd.f32 %v690, %v699
        %v705 = vadd.f32 %v691, %v701
        %s706 = sld [smem:[#allocation7 + $0x23]]
        %v707 = vld [vmem:[#allocation2 + $0x5] sm:$0xff]
        %v708 = vld [vmem:[#allocation2 + $0xd] sm:$0xff]
        %v709 = vstv %s706
        %v710 = vmul.f32 %v709, %v707
        %v711 = vmul.f32 %v709, %v708
        %v712 = vadd.f32 %v704, %v710
        %v713 = vadd.f32 %v705, %v711
        %s714 = sld [smem:[#allocation7 + $0x24]]
        %v715 = vstv %s714
        %v716 = vmul.f32 %v715, %v707
        %v717 = vmul.f32 %v715, %v708
        %720 = vrot.lane.b32.xlu0 %v716, 127
        %v721 = vpop.permute.xlu0 %720
        %722 = vrot.lane.b32.xlu0 %v717, 127
        %v723 = vpop.permute.xlu0 %722
        %v726 = vadd.f32 %v712, %v721
        %v727 = vadd.f32 %v713, %v723
        %s728 = sld [smem:[#allocation7 + $0x25]]
        %v729 = vstv %s728
        %v730 = vmul.f32 %v729, %v707
        %v731 = vmul.f32 %v729, %v708
        %734 = vrot.lane.b32.xlu0 %v730, 126
        %v735 = vpop.permute.xlu0 %734
        %736 = vrot.lane.b32.xlu0 %v731, 126
        %v737 = vpop.permute.xlu0 %736
        %v740 = vadd.f32 %v726, %v735
        %v741 = vadd.f32 %v727, %v737
        %s742 = sld [smem:[#allocation7 + $0x26]]
        %v743 = vstv %s742
        %v744 = vmul.f32 %v743, %v707
        %v745 = vmul.f32 %v743, %v708
        %748 = vrot.lane.b32.xlu0 %v744, 125
        %v749 = vpop.permute.xlu0 %748
        %750 = vrot.lane.b32.xlu0 %v745, 125
        %v751 = vpop.permute.xlu0 %750
        %v754 = vadd.f32 %v740, %v749
        %v755 = vadd.f32 %v741, %v751
        %s756 = sld [smem:[#allocation7 + $0x27]]
        %v757 = vstv %s756
        %v758 = vmul.f32 %v757, %v707
        %v759 = vmul.f32 %v757, %v708
        %762 = vrot.lane.b32.xlu0 %v758, 124
        %v763 = vpop.permute.xlu0 %762
        %764 = vrot.lane.b32.xlu0 %v759, 124
        %v765 = vpop.permute.xlu0 %764
        %v768 = vadd.f32 %v754, %v763
        %v769 = vadd.f32 %v755, %v765
        %s770 = sld [smem:[#allocation7 + $0x28]]
        %v771 = vstv %s770
        %v772 = vmul.f32 %v771, %v707
        %v773 = vmul.f32 %v771, %v708
        %776 = vrot.lane.b32.xlu0 %v772, 123
        %v777 = vpop.permute.xlu0 %776
        %778 = vrot.lane.b32.xlu0 %v773, 123
        %v779 = vpop.permute.xlu0 %778
        %v782 = vadd.f32 %v768, %v777
        %v783 = vadd.f32 %v769, %v779
        %s784 = sld [smem:[#allocation7 + $0x29]]
        %v785 = vstv %s784
        %v786 = vmul.f32 %v785, %v707
        %v787 = vmul.f32 %v785, %v708
        %790 = vrot.lane.b32.xlu0 %v786, 122
        %v791 = vpop.permute.xlu0 %790
        %792 = vrot.lane.b32.xlu0 %v787, 122
        %v793 = vpop.permute.xlu0 %792
        %v796 = vadd.f32 %v782, %v791
        %v797 = vadd.f32 %v783, %v793
        %s798 = sld [smem:[#allocation7 + $0x2a]]
        %v799 = vld [vmem:[#allocation2 + $0x6] sm:$0xff]
        %v800 = vld [vmem:[#allocation2 + $0xe] sm:$0xff]
        %v801 = vstv %s798
        %v802 = vmul.f32 %v801, %v799
        %v803 = vmul.f32 %v801, %v800
        %v804 = vadd.f32 %v796, %v802
        %v805 = vadd.f32 %v797, %v803
        %s806 = sld [smem:[#allocation7 + $0x2b]]
        %v807 = vstv %s806
        %v808 = vmul.f32 %v807, %v799
        %v809 = vmul.f32 %v807, %v800
        %812 = vrot.lane.b32.xlu0 %v808, 127
        %v813 = vpop.permute.xlu0 %812
        %814 = vrot.lane.b32.xlu0 %v809, 127
        %v815 = vpop.permute.xlu0 %814
        %v818 = vadd.f32 %v804, %v813
        %v819 = vadd.f32 %v805, %v815
        %s820 = sld [smem:[#allocation7 + $0x2c]]
        %v821 = vstv %s820
        %v822 = vmul.f32 %v821, %v799
        %v823 = vmul.f32 %v821, %v800
        %826 = vrot.lane.b32.xlu0 %v822, 126
        %v827 = vpop.permute.xlu0 %826
        %828 = vrot.lane.b32.xlu0 %v823, 126
        %v829 = vpop.permute.xlu0 %828
        %v832 = vadd.f32 %v818, %v827
        %v833 = vadd.f32 %v819, %v829
        %s834 = sld [smem:[#allocation7 + $0x2d]]
        %v835 = vstv %s834
        %v836 = vmul.f32 %v835, %v799
        %v837 = vmul.f32 %v835, %v800
        %840 = vrot.lane.b32.xlu0 %v836, 125
        %v841 = vpop.permute.xlu0 %840
        %842 = vrot.lane.b32.xlu0 %v837, 125
        %v843 = vpop.permute.xlu0 %842
        %v846 = vadd.f32 %v832, %v841
        %v847 = vadd.f32 %v833, %v843
        %s848 = sld [smem:[#allocation7 + $0x2e]]
        %v849 = vstv %s848
        %v850 = vmul.f32 %v849, %v799
        %v851 = vmul.f32 %v849, %v800
        %854 = vrot.lane.b32.xlu0 %v850, 124
        %v855 = vpop.permute.xlu0 %854
        %856 = vrot.lane.b32.xlu0 %v851, 124
        %v857 = vpop.permute.xlu0 %856
        %v860 = vadd.f32 %v846, %v855
        %v861 = vadd.f32 %v847, %v857
        %s862 = sld [smem:[#allocation7 + $0x2f]]
        %v863 = vstv %s862
        %v864 = vmul.f32 %v863, %v799
        %v865 = vmul.f32 %v863, %v800
        %868 = vrot.lane.b32.xlu0 %v864, 123
        %v869 = vpop.permute.xlu0 %868
        %870 = vrot.lane.b32.xlu0 %v865, 123
        %v871 = vpop.permute.xlu0 %870
        %v874 = vadd.f32 %v860, %v869
        %v875 = vadd.f32 %v861, %v871
        %s876 = sld [smem:[#allocation7 + $0x30]]
        %v877 = vstv %s876
        %v878 = vmul.f32 %v877, %v799
        %v879 = vmul.f32 %v877, %v800
        %882 = vrot.lane.b32.xlu0 %v878, 122
        %v883 = vpop.permute.xlu0 %882
        %884 = vrot.lane.b32.xlu0 %v879, 122
        %v885 = vpop.permute.xlu0 %884
        %v888 = vadd.f32 %v874, %v883
        %v889 = vadd.f32 %v875, %v885
        %s890 = sld [smem:[#allocation7 + $0x31]]
        %v891 = vld [vmem:[%s243] sm:$0xff]
        %v892 = vld [vmem:[%s243 + $0x8] sm:$0xff]
        %v893 = vstv %s890
        %v894 = vmul.f32 %v893, %v891
        %v895 = vmul.f32 %v893, %v892
        %v896 = vadd.f32 %v888, %v894
        %v897 = vadd.f32 %v889, %v895
        %s898 = sld [smem:[#allocation7 + $0x32]]
        %v899 = vstv %s898
        %v900 = vmul.f32 %v899, %v891
        %v901 = vmul.f32 %v899, %v892
        %904 = vrot.lane.b32.xlu0 %v900, 127
        %v905 = vpop.permute.xlu0 %904
        %906 = vrot.lane.b32.xlu0 %v901, 127
        %v907 = vpop.permute.xlu0 %906
        %v910 = vadd.f32 %v896, %v905
        %v911 = vadd.f32 %v897, %v907
        %s912 = sld [smem:[#allocation7 + $0x33]]
        %v913 = vstv %s912
        %v914 = vmul.f32 %v913, %v891
        %v915 = vmul.f32 %v913, %v892
        %918 = vrot.lane.b32.xlu0 %v914, 126
        %v919 = vpop.permute.xlu0 %918
        %920 = vrot.lane.b32.xlu0 %v915, 126
        %v921 = vpop.permute.xlu0 %920
        %v924 = vadd.f32 %v910, %v919
        %v925 = vadd.f32 %v911, %v921
        %s926 = sld [smem:[#allocation7 + $0x34]]
        %v927 = vstv %s926
        %v928 = vmul.f32 %v927, %v891
        %v929 = vmul.f32 %v927, %v892
        %932 = vrot.lane.b32.xlu0 %v928, 125
        %v933 = vpop.permute.xlu0 %932
        %934 = vrot.lane.b32.xlu0 %v929, 125
        %v935 = vpop.permute.xlu0 %934
        %v938 = vadd.f32 %v924, %v933
        %v939 = vadd.f32 %v925, %v935
        %s940 = sld [smem:[#allocation7 + $0x35]]
        %v941 = vstv %s940
        %v942 = vmul.f32 %v941, %v891
        %v943 = vmul.f32 %v941, %v892
        %946 = vrot.lane.b32.xlu0 %v942, 124
        %v947 = vpop.permute.xlu0 %946
        %948 = vrot.lane.b32.xlu0 %v943, 124
        %v949 = vpop.permute.xlu0 %948
        %v952 = vadd.f32 %v938, %v947
        %v953 = vadd.f32 %v939, %v949
        %s954 = sld [smem:[#allocation7 + $0x36]]
        %v955 = vstv %s954
        %v956 = vmul.f32 %v955, %v891
        %v957 = vmul.f32 %v955, %v892
        %960 = vrot.lane.b32.xlu0 %v956, 123
        %v961 = vpop.permute.xlu0 %960
        %962 = vrot.lane.b32.xlu0 %v957, 123
        %v963 = vpop.permute.xlu0 %962
        %v966 = vadd.f32 %v952, %v961
        %v967 = vadd.f32 %v953, %v963
        %s968 = sld [smem:[#allocation7 + $0x37]]
        %v969 = vstv %s968
        %v970 = vmul.f32 %v969, %v891
        %v971 = vmul.f32 %v969, %v892
        %974 = vrot.lane.b32.xlu0 %v970, 122
        %v975 = vpop.permute.xlu0 %974
        %976 = vrot.lane.b32.xlu0 %v971, 122
        %v977 = vpop.permute.xlu0 %976
        %v980 = vadd.f32 %v966, %v975
        %v981 = vadd.f32 %v967, %v977
        %s982 = sld [smem:[#allocation7 + $0x38]]
        %v983 = vld [vmem:[%s243 + $0x1] sm:$0xff]
        %v984 = vld [vmem:[%s243 + $0x9] sm:$0xff]
        %v985 = vstv %s982
        %v986 = vmul.f32 %v985, %v983
        %v987 = vmul.f32 %v985, %v984
        %v988 = vadd.f32 %v980, %v986
        %v989 = vadd.f32 %v981, %v987
        %s990 = sld [smem:[#allocation7 + $0x39]]
        %v991 = vstv %s990
        %v992 = vmul.f32 %v991, %v983
        %v993 = vmul.f32 %v991, %v984
        %996 = vrot.lane.b32.xlu0 %v992, 127
        %v997 = vpop.permute.xlu0 %996
        %998 = vrot.lane.b32.xlu0 %v993, 127
        %v999 = vpop.permute.xlu0 %998
        %v1002 = vadd.f32 %v988, %v997
        %v1003 = vadd.f32 %v989, %v999
        %s1004 = sld [smem:[#allocation7 + $0x3a]]
        %v1005 = vstv %s1004
        %v1006 = vmul.f32 %v1005, %v983
        %v1007 = vmul.f32 %v1005, %v984
        %1010 = vrot.lane.b32.xlu0 %v1006, 126
        %v1011 = vpop.permute.xlu0 %1010
        %1012 = vrot.lane.b32.xlu0 %v1007, 126
        %v1013 = vpop.permute.xlu0 %1012
        %v1016 = vadd.f32 %v1002, %v1011
        %v1017 = vadd.f32 %v1003, %v1013
        %s1018 = sld [smem:[#allocation7 + $0x3b]]
        %v1019 = vstv %s1018
        %v1020 = vmul.f32 %v1019, %v983
        %v1021 = vmul.f32 %v1019, %v984
        %1024 = vrot.lane.b32.xlu0 %v1020, 125
        %v1025 = vpop.permute.xlu0 %1024
        %1026 = vrot.lane.b32.xlu0 %v1021, 125
        %v1027 = vpop.permute.xlu0 %1026
        %v1030 = vadd.f32 %v1016, %v1025
        %v1031 = vadd.f32 %v1017, %v1027
        %s1032 = sld [smem:[#allocation7 + $0x3c]]
        %v1033 = vstv %s1032
        %v1034 = vmul.f32 %v1033, %v983
        %v1035 = vmul.f32 %v1033, %v984
        %1038 = vrot.lane.b32.xlu0 %v1034, 124
        %v1039 = vpop.permute.xlu0 %1038
        %1040 = vrot.lane.b32.xlu0 %v1035, 124
        %v1041 = vpop.permute.xlu0 %1040
        %v1044 = vadd.f32 %v1030, %v1039
        %v1045 = vadd.f32 %v1031, %v1041
        %s1046 = sld [smem:[#allocation7 + $0x3d]]
        %v1047 = vstv %s1046
        %v1048 = vmul.f32 %v1047, %v983
        %v1049 = vmul.f32 %v1047, %v984
        %1052 = vrot.lane.b32.xlu0 %v1048, 123
        %v1053 = vpop.permute.xlu0 %1052
        %1054 = vrot.lane.b32.xlu0 %v1049, 123
        %v1055 = vpop.permute.xlu0 %1054
        %v1058 = vadd.f32 %v1044, %v1053
        %v1059 = vadd.f32 %v1045, %v1055
        %s1060 = sld [smem:[#allocation7 + $0x3e]]
        %v1061 = vstv %s1060
        %v1062 = vmul.f32 %v1061, %v983
        %v1063 = vmul.f32 %v1061, %v984
        %1066 = vrot.lane.b32.xlu0 %v1062, 122
        %v1067 = vpop.permute.xlu0 %1066
        %1068 = vrot.lane.b32.xlu0 %v1063, 122
        %v1069 = vpop.permute.xlu0 %1068
        %v1072 = vadd.f32 %v1058, %v1067
        %v1073 = vadd.f32 %v1059, %v1069
        %s1074 = sld [smem:[#allocation7 + $0x3f]]
        %v1075 = vld [vmem:[%s243 + $0x2] sm:$0xff]
        %v1076 = vld [vmem:[%s243 + $0xa] sm:$0xff]
        %v1077 = vstv %s1074
        %v1078 = vmul.f32 %v1077, %v1075
        %v1079 = vmul.f32 %v1077, %v1076
        %v1080 = vadd.f32 %v1072, %v1078
        %v1081 = vadd.f32 %v1073, %v1079
        %s1082 = sld [smem:[#allocation7 + $0x40]]
        %v1083 = vstv %s1082
        %v1084 = vmul.f32 %v1083, %v1075
        %v1085 = vmul.f32 %v1083, %v1076
        %1088 = vrot.lane.b32.xlu0 %v1084, 127
        %v1089 = vpop.permute.xlu0 %1088
        %1090 = vrot.lane.b32.xlu0 %v1085, 127
        %v1091 = vpop.permute.xlu0 %1090
        %v1094 = vadd.f32 %v1080, %v1089
        %v1095 = vadd.f32 %v1081, %v1091
        %s1096 = sld [smem:[#allocation7 + $0x41]]
        %v1097 = vstv %s1096
        %v1098 = vmul.f32 %v1097, %v1075
        %v1099 = vmul.f32 %v1097, %v1076
        %1102 = vrot.lane.b32.xlu0 %v1098, 126
        %v1103 = vpop.permute.xlu0 %1102
        %1104 = vrot.lane.b32.xlu0 %v1099, 126
        %v1105 = vpop.permute.xlu0 %1104
        %v1108 = vadd.f32 %v1094, %v1103
        %v1109 = vadd.f32 %v1095, %v1105
        %s1110 = sld [smem:[#allocation7 + $0x42]]
        %v1111 = vstv %s1110
        %v1112 = vmul.f32 %v1111, %v1075
        %v1113 = vmul.f32 %v1111, %v1076
        %1116 = vrot.lane.b32.xlu0 %v1112, 125
        %v1117 = vpop.permute.xlu0 %1116
        %1118 = vrot.lane.b32.xlu0 %v1113, 125
        %v1119 = vpop.permute.xlu0 %1118
        %v1122 = vadd.f32 %v1108, %v1117
        %v1123 = vadd.f32 %v1109, %v1119
        %s1124 = sld [smem:[#allocation7 + $0x43]]
        %v1125 = vstv %s1124
        %v1126 = vmul.f32 %v1125, %v1075
        %v1127 = vmul.f32 %v1125, %v1076
        %1130 = vrot.lane.b32.xlu0 %v1126, 124
        %v1131 = vpop.permute.xlu0 %1130
        %1132 = vrot.lane.b32.xlu0 %v1127, 124
        %v1133 = vpop.permute.xlu0 %1132
        %v1136 = vadd.f32 %v1122, %v1131
        %v1137 = vadd.f32 %v1123, %v1133
        %s1138 = sld [smem:[#allocation7 + $0x44]]
        %v1139 = vstv %s1138
        %v1140 = vmul.f32 %v1139, %v1075
        %v1141 = vmul.f32 %v1139, %v1076
        %1144 = vrot.lane.b32.xlu0 %v1140, 123
        %v1145 = vpop.permute.xlu0 %1144
        %1146 = vrot.lane.b32.xlu0 %v1141, 123
        %v1147 = vpop.permute.xlu0 %1146
        %v1150 = vadd.f32 %v1136, %v1145
        %v1151 = vadd.f32 %v1137, %v1147
        %s1152 = sld [smem:[#allocation7 + $0x45]]
        %v1153 = vstv %s1152
        %v1154 = vmul.f32 %v1153, %v1075
        %v1155 = vmul.f32 %v1153, %v1076
        %1158 = vrot.lane.b32.xlu0 %v1154, 122
        %v1159 = vpop.permute.xlu0 %1158
        %1160 = vrot.lane.b32.xlu0 %v1155, 122
        %v1161 = vpop.permute.xlu0 %1160
        %v1164 = vadd.f32 %v1150, %v1159
        %v1165 = vadd.f32 %v1151, %v1161
        %s1166 = sld [smem:[#allocation7 + $0x46]]
        %v1167 = vld [vmem:[%s243 + $0x3] sm:$0xff]
        %v1168 = vld [vmem:[%s243 + $0xb] sm:$0xff]
        %v1169 = vstv %s1166
        %v1170 = vmul.f32 %v1169, %v1167
        %v1171 = vmul.f32 %v1169, %v1168
        %v1172 = vadd.f32 %v1164, %v1170
        %v1173 = vadd.f32 %v1165, %v1171
        %s1174 = sld [smem:[#allocation7 + $0x47]]
        %v1175 = vstv %s1174
        %v1176 = vmul.f32 %v1175, %v1167
        %v1177 = vmul.f32 %v1175, %v1168
        %1180 = vrot.lane.b32.xlu0 %v1176, 127
        %v1181 = vpop.permute.xlu0 %1180
        %1182 = vrot.lane.b32.xlu0 %v1177, 127
        %v1183 = vpop.permute.xlu0 %1182
        %v1186 = vadd.f32 %v1172, %v1181
        %v1187 = vadd.f32 %v1173, %v1183
        %s1188 = sld [smem:[#allocation7 + $0x48]]
        %v1189 = vstv %s1188
        %v1190 = vmul.f32 %v1189, %v1167
        %v1191 = vmul.f32 %v1189, %v1168
        %1194 = vrot.lane.b32.xlu0 %v1190, 126
        %v1195 = vpop.permute.xlu0 %1194
        %1196 = vrot.lane.b32.xlu0 %v1191, 126
        %v1197 = vpop.permute.xlu0 %1196
        %v1200 = vadd.f32 %v1186, %v1195
        %v1201 = vadd.f32 %v1187, %v1197
        %s1202 = sld [smem:[#allocation7 + $0x49]]
        %v1203 = vstv %s1202
        %v1204 = vmul.f32 %v1203, %v1167
        %v1205 = vmul.f32 %v1203, %v1168
        %1208 = vrot.lane.b32.xlu0 %v1204, 125
        %v1209 = vpop.permute.xlu0 %1208
        %1210 = vrot.lane.b32.xlu0 %v1205, 125
        %v1211 = vpop.permute.xlu0 %1210
        %v1214 = vadd.f32 %v1200, %v1209
        %v1215 = vadd.f32 %v1201, %v1211
        %s1216 = sld [smem:[#allocation7 + $0x4a]]
        %v1217 = vstv %s1216
        %v1218 = vmul.f32 %v1217, %v1167
        %v1219 = vmul.f32 %v1217, %v1168
        %1222 = vrot.lane.b32.xlu0 %v1218, 124
        %v1223 = vpop.permute.xlu0 %1222
        %1224 = vrot.lane.b32.xlu0 %v1219, 124
        %v1225 = vpop.permute.xlu0 %1224
        %v1228 = vadd.f32 %v1214, %v1223
        %v1229 = vadd.f32 %v1215, %v1225
        %s1230 = sld [smem:[#allocation7 + $0x4b]]
        %v1231 = vstv %s1230
        %v1232 = vmul.f32 %v1231, %v1167
        %v1233 = vmul.f32 %v1231, %v1168
        %1236 = vrot.lane.b32.xlu0 %v1232, 123
        %v1237 = vpop.permute.xlu0 %1236
        %1238 = vrot.lane.b32.xlu0 %v1233, 123
        %v1239 = vpop.permute.xlu0 %1238
        %v1242 = vadd.f32 %v1228, %v1237
        %v1243 = vadd.f32 %v1229, %v1239
        %s1244 = sld [smem:[#allocation7 + $0x4c]]
        %v1245 = vstv %s1244
        %v1246 = vmul.f32 %v1245, %v1167
        %v1247 = vmul.f32 %v1245, %v1168
        %1250 = vrot.lane.b32.xlu0 %v1246, 122
        %v1251 = vpop.permute.xlu0 %1250
        %1252 = vrot.lane.b32.xlu0 %v1247, 122
        %v1253 = vpop.permute.xlu0 %1252
        %v1256 = vadd.f32 %v1242, %v1251
        %v1257 = vadd.f32 %v1243, %v1253
        %s1258 = sld [smem:[#allocation7 + $0x4d]]
        %v1259 = vld [vmem:[%s243 + $0x4] sm:$0xff]
        %v1260 = vld [vmem:[%s243 + $0xc] sm:$0xff]
        %v1261 = vstv %s1258
        %v1262 = vmul.f32 %v1261, %v1259
        %v1263 = vmul.f32 %v1261, %v1260
        %v1264 = vadd.f32 %v1256, %v1262
        %v1265 = vadd.f32 %v1257, %v1263
        %s1266 = sld [smem:[#allocation7 + $0x4e]]
        %v1267 = vstv %s1266
        %v1268 = vmul.f32 %v1267, %v1259
        %v1269 = vmul.f32 %v1267, %v1260
        %1272 = vrot.lane.b32.xlu0 %v1268, 127
        %v1273 = vpop.permute.xlu0 %1272
        %1274 = vrot.lane.b32.xlu0 %v1269, 127
        %v1275 = vpop.permute.xlu0 %1274
        %v1278 = vadd.f32 %v1264, %v1273
        %v1279 = vadd.f32 %v1265, %v1275
        %s1280 = sld [smem:[#allocation7 + $0x4f]]
        %v1281 = vstv %s1280
        %v1282 = vmul.f32 %v1281, %v1259
        %v1283 = vmul.f32 %v1281, %v1260
        %1286 = vrot.lane.b32.xlu0 %v1282, 126
        %v1287 = vpop.permute.xlu0 %1286
        %1288 = vrot.lane.b32.xlu0 %v1283, 126
        %v1289 = vpop.permute.xlu0 %1288
        %v1292 = vadd.f32 %v1278, %v1287
        %v1293 = vadd.f32 %v1279, %v1289
        %s1294 = sld [smem:[#allocation7 + $0x50]]
        %v1295 = vstv %s1294
        %v1296 = vmul.f32 %v1295, %v1259
        %v1297 = vmul.f32 %v1295, %v1260
        %1300 = vrot.lane.b32.xlu0 %v1296, 125
        %v1301 = vpop.permute.xlu0 %1300
        %1302 = vrot.lane.b32.xlu0 %v1297, 125
        %v1303 = vpop.permute.xlu0 %1302
        %v1306 = vadd.f32 %v1292, %v1301
        %v1307 = vadd.f32 %v1293, %v1303
        %s1308 = sld [smem:[#allocation7 + $0x51]]
        %v1309 = vstv %s1308
        %v1310 = vmul.f32 %v1309, %v1259
        %v1311 = vmul.f32 %v1309, %v1260
        %1314 = vrot.lane.b32.xlu0 %v1310, 124
        %v1315 = vpop.permute.xlu0 %1314
        %1316 = vrot.lane.b32.xlu0 %v1311, 124
        %v1317 = vpop.permute.xlu0 %1316
        %v1320 = vadd.f32 %v1306, %v1315
        %v1321 = vadd.f32 %v1307, %v1317
        %s1322 = sld [smem:[#allocation7 + $0x52]]
        %v1323 = vstv %s1322
        %v1324 = vmul.f32 %v1323, %v1259
        %v1325 = vmul.f32 %v1323, %v1260
        %1328 = vrot.lane.b32.xlu0 %v1324, 123
        %v1329 = vpop.permute.xlu0 %1328
        %1330 = vrot.lane.b32.xlu0 %v1325, 123
        %v1331 = vpop.permute.xlu0 %1330
        %v1334 = vadd.f32 %v1320, %v1329
        %v1335 = vadd.f32 %v1321, %v1331
        %s1336 = sld [smem:[#allocation7 + $0x53]]
        %v1337 = vstv %s1336
        %v1338 = vmul.f32 %v1337, %v1259
        %v1339 = vmul.f32 %v1337, %v1260
        %1342 = vrot.lane.b32.xlu0 %v1338, 122
        %v1343 = vpop.permute.xlu0 %1342
        %1344 = vrot.lane.b32.xlu0 %v1339, 122
        %v1345 = vpop.permute.xlu0 %1344
        %v1348 = vadd.f32 %v1334, %v1343
        %v1349 = vadd.f32 %v1335, %v1345
        %s1350 = sld [smem:[#allocation7 + $0x54]]
        %v1351 = vld [vmem:[%s243 + $0x5] sm:$0xff]
        %v1352 = vld [vmem:[%s243 + $0xd] sm:$0xff]
        %v1353 = vstv %s1350
        %v1354 = vmul.f32 %v1353, %v1351
        %v1355 = vmul.f32 %v1353, %v1352
        %v1356 = vadd.f32 %v1348, %v1354
        %v1357 = vadd.f32 %v1349, %v1355
        %s1358 = sld [smem:[#allocation7 + $0x55]]
        %v1359 = vstv %s1358
        %v1360 = vmul.f32 %v1359, %v1351
        %v1361 = vmul.f32 %v1359, %v1352
        %1364 = vrot.lane.b32.xlu0 %v1360, 127
        %v1365 = vpop.permute.xlu0 %1364
        %1366 = vrot.lane.b32.xlu0 %v1361, 127
        %v1367 = vpop.permute.xlu0 %1366
        %v1370 = vadd.f32 %v1356, %v1365
        %v1371 = vadd.f32 %v1357, %v1367
        %s1372 = sld [smem:[#allocation7 + $0x56]]
        %v1373 = vstv %s1372
        %v1374 = vmul.f32 %v1373, %v1351
        %v1375 = vmul.f32 %v1373, %v1352
        %1378 = vrot.lane.b32.xlu0 %v1374, 126
        %v1379 = vpop.permute.xlu0 %1378
        %1380 = vrot.lane.b32.xlu0 %v1375, 126
        %v1381 = vpop.permute.xlu0 %1380
        %v1384 = vadd.f32 %v1370, %v1379
        %v1385 = vadd.f32 %v1371, %v1381
        %s1386 = sld [smem:[#allocation7 + $0x57]]
        %v1387 = vstv %s1386
        %v1388 = vmul.f32 %v1387, %v1351
        %v1389 = vmul.f32 %v1387, %v1352
        %1392 = vrot.lane.b32.xlu0 %v1388, 125
        %v1393 = vpop.permute.xlu0 %1392
        %1394 = vrot.lane.b32.xlu0 %v1389, 125
        %v1395 = vpop.permute.xlu0 %1394
        %v1398 = vadd.f32 %v1384, %v1393
        %v1399 = vadd.f32 %v1385, %v1395
        %s1400 = sld [smem:[#allocation7 + $0x58]]
        %v1401 = vstv %s1400
        %v1402 = vmul.f32 %v1401, %v1351
        %v1403 = vmul.f32 %v1401, %v1352
        %1406 = vrot.lane.b32.xlu0 %v1402, 124
        %v1407 = vpop.permute.xlu0 %1406
        %1408 = vrot.lane.b32.xlu0 %v1403, 124
        %v1409 = vpop.permute.xlu0 %1408
        %v1412 = vadd.f32 %v1398, %v1407
        %v1413 = vadd.f32 %v1399, %v1409
        %s1414 = sld [smem:[#allocation7 + $0x59]]
        %v1415 = vstv %s1414
        %v1416 = vmul.f32 %v1415, %v1351
        %v1417 = vmul.f32 %v1415, %v1352
        %1420 = vrot.lane.b32.xlu0 %v1416, 123
        %v1421 = vpop.permute.xlu0 %1420
        %1422 = vrot.lane.b32.xlu0 %v1417, 123
        %v1423 = vpop.permute.xlu0 %1422
        %v1426 = vadd.f32 %v1412, %v1421
        %v1427 = vadd.f32 %v1413, %v1423
        %s1428 = sld [smem:[#allocation7 + $0x5a]]
        %v1429 = vstv %s1428
        %v1430 = vmul.f32 %v1429, %v1351
        %v1431 = vmul.f32 %v1429, %v1352
        %1434 = vrot.lane.b32.xlu0 %v1430, 122
        %v1435 = vpop.permute.xlu0 %1434
        %1436 = vrot.lane.b32.xlu0 %v1431, 122
        %v1437 = vpop.permute.xlu0 %1436
        %v1440 = vadd.f32 %v1426, %v1435
        %v1441 = vadd.f32 %v1427, %v1437
        %s1442 = sld [smem:[#allocation7 + $0x5b]]
        %v1443 = vld [vmem:[%s243 + $0x6] sm:$0xff]
        %v1444 = vld [vmem:[%s243 + $0xe] sm:$0xff]
        %v1445 = vstv %s1442
        %v1446 = vmul.f32 %v1445, %v1443
        %v1447 = vmul.f32 %v1445, %v1444
        %v1448 = vadd.f32 %v1440, %v1446
        %v1449 = vadd.f32 %v1441, %v1447
        %s1450 = sld [smem:[#allocation7 + $0x5c]]
        %v1451 = vstv %s1450
        %v1452 = vmul.f32 %v1451, %v1443
        %v1453 = vmul.f32 %v1451, %v1444
        %1456 = vrot.lane.b32.xlu0 %v1452, 127
        %v1457 = vpop.permute.xlu0 %1456
        %1458 = vrot.lane.b32.xlu0 %v1453, 127
        %v1459 = vpop.permute.xlu0 %1458
        %v1462 = vadd.f32 %v1448, %v1457
        %v1463 = vadd.f32 %v1449, %v1459
        %s1464 = sld [smem:[#allocation7 + $0x5d]]
        %v1465 = vstv %s1464
        %v1466 = vmul.f32 %v1465, %v1443
        %v1467 = vmul.f32 %v1465, %v1444
        %1470 = vrot.lane.b32.xlu0 %v1466, 126
        %v1471 = vpop.permute.xlu0 %1470
        %1472 = vrot.lane.b32.xlu0 %v1467, 126
        %v1473 = vpop.permute.xlu0 %1472
        %v1476 = vadd.f32 %v1462, %v1471
        %v1477 = vadd.f32 %v1463, %v1473
        %s1478 = sld [smem:[#allocation7 + $0x5e]]
        %v1479 = vstv %s1478
        %v1480 = vmul.f32 %v1479, %v1443
        %v1481 = vmul.f32 %v1479, %v1444
        %1484 = vrot.lane.b32.xlu0 %v1480, 125
        %v1485 = vpop.permute.xlu0 %1484
        %1486 = vrot.lane.b32.xlu0 %v1481, 125
        %v1487 = vpop.permute.xlu0 %1486
        %v1490 = vadd.f32 %v1476, %v1485
        %v1491 = vadd.f32 %v1477, %v1487
        %s1492 = sld [smem:[#allocation7 + $0x5f]]
        %v1493 = vstv %s1492
        %v1494 = vmul.f32 %v1493, %v1443
        %v1495 = vmul.f32 %v1493, %v1444
        %1498 = vrot.lane.b32.xlu0 %v1494, 124
        %v1499 = vpop.permute.xlu0 %1498
        %1500 = vrot.lane.b32.xlu0 %v1495, 124
        %v1501 = vpop.permute.xlu0 %1500
        %v1504 = vadd.f32 %v1490, %v1499
        %v1505 = vadd.f32 %v1491, %v1501
        %s1506 = sld [smem:[#allocation7 + $0x60]]
        %v1507 = vstv %s1506
        %v1508 = vmul.f32 %v1507, %v1443
        %v1509 = vmul.f32 %v1507, %v1444
        %1512 = vrot.lane.b32.xlu0 %v1508, 123
        %v1513 = vpop.permute.xlu0 %1512
        %1514 = vrot.lane.b32.xlu0 %v1509, 123
        %v1515 = vpop.permute.xlu0 %1514
        %v1518 = vadd.f32 %v1504, %v1513
        %v1519 = vadd.f32 %v1505, %v1515
        %s1520 = sld [smem:[#allocation7 + $0x61]]
        %v1521 = vstv %s1520
        %v1522 = vmul.f32 %v1521, %v1443
        %v1523 = vmul.f32 %v1521, %v1444
        %1526 = vrot.lane.b32.xlu0 %v1522, 122
        %v1527 = vpop.permute.xlu0 %1526
        %1528 = vrot.lane.b32.xlu0 %v1523, 122
        %v1529 = vpop.permute.xlu0 %1528
        %v1532 = vadd.f32 %v1518, %v1527
        %v1533 = vadd.f32 %v1519, %v1529
        %v1534 = vsub.f32 0.0, %v1532
        %v1535 = vsub.f32 0.0, %v1533
        %v1536 = vmul.f32 %v1534, 1.442695
        %v1537 = vpow.pop %v1536
        %v1538 = vmul.f32 %v1535, 1.442695
        %v1539 = vpow.pop %v1538
        %v1540 = vadd.f32 %v1537, 1.0
        %v1541 = vadd.f32 %v1539, 1.0
        %v1542 = vrcp.pop %v1540
        %v1543 = vmul.f32 1.0, %v1542
        %v1544 = vrcp.pop %v1541
        %v1545 = vmul.f32 1.0, %v1544
        %1546 = vst.msk [vmem:[%s175] sm:$0xff] %vm184, %v1543
        %1547 = vst.msk [vmem:[%s175 + $0x8] sm:$0xff] %vm184, %v1545
        %s1548 = sand.u32 %s75, 1
        %s1549 = scalar_lea.sflag [#allocation5], %s1548
        %s1550 = sand.u32 %s75, 1
        %s1551 = smul.addr %s1550, 16
        %s1552 = scalar_lea.vmem [#allocation8], %s1551
        // Predicated region
        $region37: #{tpu_custom_call.1} parent=27 // pred_check
          %p1553 = pneg %p85
        $region38: #{tpu_custom_call.1} parent=27 // pred_check_branch
          %1555 = sbr.rel (%p1553) target = $region40
        $region39: #{tpu_custom_call.1} parent=27 // pred_region
          %s1557 = ssub.s32 256, 256
          %1558 = vsyncadd %s1549, %s1557
          %s1559 = smul.addr %s20, 2
          %s1560 = smul.addr %s1559, 128
          %s1561 = scalar_lea.hbm %s2, %s1560
          %s1562 = sshll.u32 %s1552, 4
          %s1563 = int_to_ptr.vmem [resolvable:$true] %s1562
          %1568 = dma.vmem_to_hbm [thread:$0]  %s1563, 256, %s1561, %s1549, 128, 128, 8
        $region40: #{tpu_custom_call.1} parent=27 // pred_fallthru
          _
      $region28: #{tpu_custom_call.1} parent=5 // pred_fallthru
        _
      %p1569 = scmp.le.s32.totalorder 2, %s15
      // Predicated region
      $region41: #{tpu_custom_call.1} parent=5 // pred_check
        %p1570 = pneg %p1569
      $region42: #{tpu_custom_call.1} parent=5 // pred_check_branch
        %1572 = sbr.rel (%p1570) target = $region44
      $region43: #{tpu_custom_call.1} parent=5 // pred_region
        %s1573 = ssub.s32 %s15, 2
        // Predicated region
        $region45: #{tpu_custom_call.1} parent=43 // pred_check
          %p1574 = pneg %p91
        $region46: #{tpu_custom_call.1} parent=43 // pred_check_branch
          %1576 = sbr.rel (%p1574) target = $region48
        $region47: #{tpu_custom_call.1} parent=43 // pred_region
          %s1577 = sand.u32 %s76, 1
          %s1578 = scalar_lea.sflag [#allocation5], %s1577
          %s1579 = sand.u32 %s76, 1
          %s1580 = smul.addr %s1579, 16
          %s1581 = scalar_lea.vmem [#allocation8], %s1580
          %1582 = dma.done %s1578, 256
        $region48: #{tpu_custom_call.1} parent=43 // pred_fallthru
          _
      $region44: #{tpu_custom_call.1} parent=5 // pred_fallthru
        _
    $region6: #{tpu_custom_call.1} parent=1 // loop_footer
      %s19 = sadd.s32 1, %s15
    $region7: #{tpu_custom_call.1} parent=1 // loop_footer_branch
      %14 = sbr.rel target = $region3
    $region8: #{tpu_custom_call.1} parent=1 // loop_exit
      _
    %1583 = vsyncpa [#allocation4], 1
    %s1584 = scalar_lea.sflag [#allocation4], 1
    %1585 = vsyncpa %s1584, 1
    %1586 = vsyncpa [#allocation5], 1
    %s1587 = scalar_lea.sflag [#allocation5], 1
    %1588 = vsyncpa %s1587, 1
    %1589 = vsyncpa [#allocation6], 1
    %s1590 = scalar_lea.sflag [#allocation6], 1
    %1591 = vsyncpa %s1590, 1

</llo_original>
